<compile_context>
chip_gen: v7x
topology: tpu7x:2x2x1
jax: 0.10.0
libtpu: 0.0.40
codegen_flags: <defaults>
</compile_context>

<pallas_src>
import functools
import math

import jax
import jax.numpy as jnp
from jax.experimental import pallas as pl
from jax.experimental.pallas import tpu as pltpu

_SQRT_HALF = 1.0 / math.sqrt(2.0)


def _erf(z):
    # Abramowitz & Stegun 7.1.26 polynomial approximation of erf
    # (max abs error ~1.5e-7) -- an intentional, documented approximation of
    # PyTorch's exact torch.erf; built only from ops with guaranteed Mosaic
    # lowerings (abs, exp, mul/add/div, where).
    p = 0.3275911
    a1, a2, a3, a4, a5 = (0.254829592, -0.284496736, 1.421413741,
                          -1.453152027, 1.061405429)
    az = jnp.abs(z)
    t = 1.0 / (1.0 + p * az)
    poly = ((((a5 * t + a4) * t + a3) * t + a2) * t + a1) * t
    y = 1.0 - poly * jnp.exp(-az * az)
    return jnp.where(z >= 0, y, -y)


def _lm_head_kernel(x_ref, w1_ref, b1_ref, g_ref, beta_ref,
                    wdec_ref, bdec_ref, o_ref, t_ref, *, eps):
    # INVARIANT: the cached transform in t_ref is only valid because the vocab
    # grid axis (axis 1) is the innermost, sequential ("arbitrary") axis and the
    # row axis is the parallel one.  Do not reorder the grid or mark axis 1
    # "parallel" -- t_ref would become stale/racy.

    # --- transform: computed once per row block, cached in VMEM scratch ---
    @pl.when(pl.program_id(1) == 0)
    def _():
        h = jnp.dot(x_ref[...], w1_ref[...],
                    preferred_element_type=jnp.float32) + b1_ref[...]
        # exact-erf GELU, in f32
        h = h * 0.5 * (1.0 + _erf(h * _SQRT_HALF))
        # TF-style LayerNorm (eps inside the sqrt), in f32
        u = jnp.mean(h, axis=-1, keepdims=True)
        d = h - u
        s = jnp.mean(d * d, axis=-1, keepdims=True)
        normed = d * jax.lax.rsqrt(s + eps)
        # Cache in the decoder-weight dtype: one cast here instead of one per
        # vocab tile, and half the scratch VMEM when the decoder is bf16.
        t_ref[...] = (g_ref[...] * normed + beta_ref[...]).astype(t_ref.dtype)

    # --- decoder: lane-dense (tm, tv) logits tile per grid step ---
    o_ref[...] = (jnp.dot(t_ref[...], wdec_ref[...],
                          preferred_element_type=jnp.float32)
                  + bdec_ref[...]).astype(o_ref.dtype)


def _round_up(a, b):
    return (a + b - 1) // b * b


def _select_tiles(M, D, V, x_bytes, wt_bytes, wdec_bytes, out_bytes):
    """Pick (tm, tv, vmem_limit_bytes) sized to this chip's VMEM."""
    try:
        cap = int(pltpu.get_tpu_info().vmem_capacity_bytes)
    except Exception:
        cap = 64 * 1024 * 1024  # conservative (v7x-sized) fallback
    # ~85% of physical VMEM (~54 MiB on v7x, ~108 MiB on v5e/v6e) with headroom
    # for compiler-internal scratch -- never the full physical capacity.
    vmem_limit = max(32 * 1024 * 1024, min(cap - (8 << 20), int(cap * 0.85)))
    budget = vmem_limit - (2 << 20)

    # Row tile: big to amortise W_dec re-streaming (traffic ~ (M/tm)*D*V*bytes).
    tm = min(1024, _round_up(M, 8))
    if M > 8 and pl.cdiv(M, tm) < 2:
        # Keep >= 2 row blocks so the "parallel" row axis can shard across both
        # TensorCores on v7x (no-op on single-TC v5e/v6e).
        tm = max(8, _round_up(pl.cdiv(M, 2), 8))
    # Vocab tile: lane-dense multiple of 128; big to cut per-step overhead.
    tv = min(2048, _round_up(V, 128))

    def usage(tm_, tv_):
        return (2 * tm_ * D * x_bytes          # x tile (double-buffered)
                + D * D * wt_bytes             # w_t (single-buffered, invariant)
                + 16 * D * 4                   # b_t / gamma / beta (negligible)
                + 2 * D * tv_ * wdec_bytes     # w_dec tile (double-buffered)
                + 2 * tv_ * wdec_bytes         # b_dec tile
                + 2 * tm_ * tv_ * out_bytes    # logits tile (double-buffered)
                + tm_ * D * wdec_bytes)        # cached transform scratch

    while usage(tm, tv) > budget and tv > 128:
        tv = max(128, (tv // 2) // 128 * 128)
    while usage(tm, tv) > budget and tm > 8:
        tm = max(8, (tm // 2) // 8 * 8)
    return tm, tv, vmem_limit


def bert_lm_prediction_head(x, params, *, eps=1e-12, tm=None, tv=None):
    """x: (N, L, D) -> logits (N, L, V).

    params:
      w_t (D, D), b_t (1, D)          -- transform dense (stored as in @ out)
      ln_gamma (1, D), ln_beta (1, D) -- LayerNorm
      w_dec (D, V)                    -- decoder weight (no bias in the Linear)
      b_dec (1, V)                    -- separate vocab bias parameter
    Any of x / weights may be bf16; accumulation is always f32 on the MXU.
    """
    N, L, D = x.shape
    V = params["w_dec"].shape[1]
    M = N * L

    x_bytes = jnp.dtype(x.dtype).itemsize
    wt_bytes = jnp.dtype(params["w_t"].dtype).itemsize
    wdec_dtype = params["w_dec"].dtype
    wdec_bytes = jnp.dtype(wdec_dtype).itemsize
    out_dtype = x.dtype
    out_bytes = jnp.dtype(out_dtype).itemsize

    auto_tm, auto_tv, vmem_limit = _select_tiles(
        M, D, V, x_bytes, wt_bytes, wdec_bytes, out_bytes)
    if tm is None:
        tm = auto_tm
    if tv is None:
        tv = auto_tv
    assert tm % 8 == 0 and tv % 128 == 0, (tm, tv)

    # Pad rows / vocab so real shapes (arbitrary M, V=30522, ...) work and every
    # logits tile stays lane-dense (unmasked stores).
    M_pad = _round_up(M, tm)
    V_pad = _round_up(V, tv)

    x2 = x.reshape(M, D)
    if M_pad != M:
        x2 = jnp.pad(x2, ((0, M_pad - M), (0, 0)))
    w_dec, b_dec = params["w_dec"], params["b_dec"]
    if V_pad != V:
        w_dec = jnp.pad(w_dec, ((0, 0), (0, V_pad - V)))
        b_dec = jnp.pad(b_dec, ((0, 0), (0, V_pad - V)))

    kernel = functools.partial(_lm_head_kernel, eps=eps)
    grid = (M_pad // tm, V_pad // tv)

    def call(single_buffer_invariants):
        # Grid-invariant operands (constant index_map): single-buffer to save VMEM.
        inv_kw = ({"pipeline_mode": pl.Buffered(1)}
                  if single_buffer_invariants else {})
        return pl.pallas_call(
            kernel,
            out_shape=jax.ShapeDtypeStruct((M_pad, V_pad), out_dtype),
            grid=grid,
            in_specs=[
                pl.BlockSpec((tm, D), lambda i, j: (i, 0)),              # x rows
                pl.BlockSpec((D, D), lambda i, j: (0, 0), **inv_kw),     # w_t
                pl.BlockSpec((1, D), lambda i, j: (0, 0), **inv_kw),     # b_t
                pl.BlockSpec((1, D), lambda i, j: (0, 0), **inv_kw),     # gamma
                pl.BlockSpec((1, D), lambda i, j: (0, 0), **inv_kw),     # beta
                pl.BlockSpec((D, tv), lambda i, j: (0, j)),              # w_dec tile
                pl.BlockSpec((1, tv), lambda i, j: (0, j)),              # b_dec tile
            ],
            out_specs=pl.BlockSpec((tm, tv), lambda i, j: (i, j)),
            scratch_shapes=[pltpu.VMEM((tm, D), wdec_dtype)],            # cached transform
            compiler_params=pltpu.CompilerParams(
                dimension_semantics=("parallel", "arbitrary"),
                vmem_limit_bytes=int(vmem_limit),
            ),
        )(x2, params["w_t"], params["b_t"], params["ln_gamma"],
          params["ln_beta"], w_dec, b_dec)

    try:
        out = call(True)
    except Exception:
        # Fallback for JAX versions that reject pipeline_mode=pl.Buffered(1);
        # identical kernel, default (double) buffering on the invariant operands.
        out = call(False)

    if M_pad != M or V_pad != V:
        out = out[:M, :V]
    return out.reshape(N, L, V)


def _reference(x, params, *, eps=1e-12):
    """Pure-JAX reference mirroring the PyTorch forward."""
    h = x @ params["w_t"] + params["b_t"][0]
    h = h * 0.5 * (1.0 + jax.lax.erf(h / math.sqrt(2.0)))
    u = h.mean(-1, keepdims=True)
    s = ((h - u) ** 2).mean(-1, keepdims=True)
    h = params["ln_gamma"][0] * ((h - u) / jnp.sqrt(s + eps)) + params["ln_beta"][0]
    return h @ params["w_dec"] + params["b_dec"][0]


if __name__ == "__main__":
    # Deliberately unaligned sizes (M = 2*9 = 18 rows, V = 250 vocab) to exercise
    # the new row/vocab padding path.
    N, L, D, V = 2, 9, 32, 250
    eps = 1e-12

    key = jax.random.PRNGKey(0)
    keys = jax.random.split(key, 8)

    scale = 0.05
    params = {
        "w_t": scale * jax.random.normal(keys[0], (D, D), jnp.float32),
        "b_t": scale * jax.random.normal(keys[1], (1, D), jnp.float32),
        "ln_gamma": 1.0 + 0.1 * jax.random.normal(keys[2], (1, D), jnp.float32),
        "ln_beta": 0.1 * jax.random.normal(keys[3], (1, D), jnp.float32),
        "w_dec": scale * jax.random.normal(keys[4], (D, V), jnp.float32),
        "b_dec": scale * jax.random.normal(keys[5], (1, V), jnp.float32),
    }
    x = jax.random.normal(keys[6], (N, L, D), jnp.float32)

    # f32 path: check against the pure-JAX reference.
    out = jax.block_until_ready(bert_lm_prediction_head(x, params, eps=eps))
    ref = _reference(x, params, eps=eps)
    assert out.shape == (N, L, V)
    max_err = float(jnp.max(jnp.abs(out - ref)))
    assert jnp.allclose(out, ref, atol=1e-4, rtol=1e-4), max_err

    # bf16 streaming path (perf recommendation): bf16 weights/activations/logits,
    # f32 MXU accumulation inside the kernel.  Smoke-check shape / finiteness.
    params_bf16 = jax.tree_util.tree_map(lambda a: a.astype(jnp.bfloat16), params)
    out_bf16 = jax.block_until_ready(
        bert_lm_prediction_head(x.astype(jnp.bfloat16), params_bf16, eps=eps))
    assert out_bf16.shape == (N, L, V) and out_bf16.dtype == jnp.bfloat16
    assert bool(jnp.all(jnp.isfinite(out_bf16.astype(jnp.float32))))

    print("KERNEL_OK")
</pallas_src>

<mosaic_0001>
module attributes {stable_mosaic.version = 11 : i64} {
  func.func @_lm_head_kernel(%arg0: i32, %arg1: i32, %arg2: memref<16x32xf32, #tpu.memory_space<vmem>>, %arg3: memref<32x32xf32, #tpu.memory_space<vmem>>, %arg4: memref<1x32xf32, #tpu.memory_space<vmem>>, %arg5: memref<1x32xf32, #tpu.memory_space<vmem>>, %arg6: memref<1x32xf32, #tpu.memory_space<vmem>>, %arg7: memref<32x256xf32, #tpu.memory_space<vmem>>, %arg8: memref<1x256xf32, #tpu.memory_space<vmem>>, %arg9: memref<16x256xf32, #tpu.memory_space<vmem>>, %arg10: memref<16x32xf32, #tpu.memory_space<vmem>>) attributes {dimension_semantics = [#tpu.dimension_semantics<parallel>, #tpu.dimension_semantics<arbitrary>], iteration_bounds = array<i64: 2, 1>, scalar_prefetch = 0 : i64, scratch_operands = 1 : i64, tpu.core_type = #tpu.core_type<tc>, window_params = [{transform_indices = @transform_0, window_bounds = array<i64: 16, 32>}, {pipeline_mode = #tpu.pipeline_mode<synchronous>, transform_indices = @transform_1, window_bounds = array<i64: 32, 32>}, {pipeline_mode = #tpu.pipeline_mode<synchronous>, transform_indices = @transform_2, window_bounds = array<i64: 1, 32>}, {pipeline_mode = #tpu.pipeline_mode<synchronous>, transform_indices = @transform_3, window_bounds = array<i64: 1, 32>}, {pipeline_mode = #tpu.pipeline_mode<synchronous>, transform_indices = @transform_4, window_bounds = array<i64: 1, 32>}, {transform_indices = @transform_5, window_bounds = array<i64: 32, 256>}, {transform_indices = @transform_6, window_bounds = array<i64: 1, 256>}, {transform_indices = @transform_7, window_bounds = array<i64: 16, 256>}]} {
    %c0_i32 = arith.constant 0 : i32
    %0 = arith.cmpi eq, %arg1, %c0_i32 : i32
    %1 = arith.extui %0 : i1 to i32
    %c0_i32_0 = arith.constant 0 : i32
    %2 = arith.cmpi ne, %1, %c0_i32_0 : i32
    scf.if %2 {
      %c0_8 = arith.constant 0 : index
      %c0_9 = arith.constant 0 : index
      %10 = vector.load %arg2[%c0_8, %c0_9] : memref<16x32xf32, #tpu.memory_space<vmem>>, vector<16x32xf32>
      %c0_10 = arith.constant 0 : index
      %c0_11 = arith.constant 0 : index
      %11 = vector.load %arg3[%c0_10, %c0_11] : memref<32x32xf32, #tpu.memory_space<vmem>>, vector<32x32xf32>
      %cst_12 = arith.constant dense<0.000000e+00> : vector<16x32xf32>
      %12 = tpu.matmul %10, %11, %cst_12 {dimension_numbers = #tpu.dot_dimension_numbers<[1], [0], [0], [1], [0, 0, 1, 1], [], []>} : vector<16x32xf32>, vector<32x32xf32>, vector<16x32xf32> -> vector<16x32xf32>
      %c0_13 = arith.constant 0 : index
      %c0_14 = arith.constant 0 : index
      %13 = vector.load %arg4[%c0_13, %c0_14] : memref<1x32xf32, #tpu.memory_space<vmem>>, vector<1x32xf32>
      %14 = vector.broadcast %13 : vector<1x32xf32> to vector<16x32xf32>
      %15 = arith.addf %12, %14 : vector<16x32xf32>
      %cst_15 = arith.constant 5.000000e-01 : f32
      %16 = vector.broadcast %cst_15 : f32 to vector<16x32xf32>
      %17 = arith.mulf %15, %16 : vector<16x32xf32>
      %cst_16 = arith.constant 0.707106769 : f32
      %18 = vector.broadcast %cst_16 : f32 to vector<16x32xf32>
      %19 = arith.mulf %15, %18 : vector<16x32xf32>
      %20 = math.absf %19 : vector<16x32xf32>
      %cst_17 = arith.constant 0.327591091 : f32
      %21 = vector.broadcast %cst_17 : f32 to vector<16x32xf32>
      %22 = arith.mulf %21, %20 : vector<16x32xf32>
      %cst_18 = arith.constant 1.000000e+00 : f32
      %23 = vector.broadcast %cst_18 : f32 to vector<16x32xf32>
      %24 = arith.addf %23, %22 : vector<16x32xf32>
      %cst_19 = arith.constant 1.000000e+00 : f32
      %25 = vector.broadcast %cst_19 : f32 to vector<16x32xf32>
      %26 = arith.divf %25, %24 : vector<16x32xf32>
      %cst_20 = arith.constant 1.06140542 : f32
      %27 = vector.broadcast %cst_20 : f32 to vector<16x32xf32>
      %28 = arith.mulf %27, %26 : vector<16x32xf32>
      %cst_21 = arith.constant -1.45315206 : f32
      %29 = vector.broadcast %cst_21 : f32 to vector<16x32xf32>
      %30 = arith.addf %28, %29 : vector<16x32xf32>
      %31 = arith.mulf %30, %26 : vector<16x32xf32>
      %cst_22 = arith.constant 1.42141378 : f32
      %32 = vector.broadcast %cst_22 : f32 to vector<16x32xf32>
      %33 = arith.addf %31, %32 : vector<16x32xf32>
      %34 = arith.mulf %33, %26 : vector<16x32xf32>
      %cst_23 = arith.constant -0.284496725 : f32
      %35 = vector.broadcast %cst_23 : f32 to vector<16x32xf32>
      %36 = arith.addf %34, %35 : vector<16x32xf32>
      %37 = arith.mulf %36, %26 : vector<16x32xf32>
      %cst_24 = arith.constant 0.254829586 : f32
      %38 = vector.broadcast %cst_24 : f32 to vector<16x32xf32>
      %39 = arith.addf %37, %38 : vector<16x32xf32>
      %40 = arith.mulf %39, %26 : vector<16x32xf32>
      %cst_25 = arith.constant 0.000000e+00 : f32
      %41 = vector.broadcast %cst_25 : f32 to vector<16x32xf32>
      %42 = arith.subf %41, %20 : vector<16x32xf32>
      %43 = arith.mulf %42, %20 : vector<16x32xf32>
      %44 = math.exp %43 : vector<16x32xf32>
      %45 = arith.mulf %40, %44 : vector<16x32xf32>
      %cst_26 = arith.constant 1.000000e+00 : f32
      %46 = vector.broadcast %cst_26 : f32 to vector<16x32xf32>
      %47 = arith.subf %46, %45 : vector<16x32xf32>
      %cst_27 = arith.constant 0.000000e+00 : f32
      %48 = vector.broadcast %cst_27 : f32 to vector<16x32xf32>
      %49 = arith.cmpf oge, %19, %48 : vector<16x32xf32>
      %cst_28 = arith.constant 0.000000e+00 : f32
      %50 = vector.broadcast %cst_28 : f32 to vector<16x32xf32>
      %51 = arith.subf %50, %47 : vector<16x32xf32>
      %52 = arith.select %49, %47, %51 : vector<16x32xi1>, vector<16x32xf32>
      %cst_29 = arith.constant 1.000000e+00 : f32
      %53 = vector.broadcast %cst_29 : f32 to vector<16x32xf32>
      %54 = arith.addf %53, %52 : vector<16x32xf32>
      %55 = arith.mulf %17, %54 : vector<16x32xf32>
      %cst_30 = arith.constant dense<0.000000e+00> : vector<16xf32>
      %56 = vector.multi_reduction <add>, %55, %cst_30 [1] : vector<16x32xf32> to vector<16xf32>
      %57 = vector.shape_cast %56 : vector<16xf32> to vector<16x1xf32>
      %cst_31 = arith.constant 3.200000e+01 : f32
      %58 = vector.broadcast %cst_31 : f32 to vector<16x1xf32>
      %59 = arith.divf %57, %58 : vector<16x1xf32>
      %60 = vector.broadcast %59 : vector<16x1xf32> to vector<16x32xf32>
      %61 = arith.subf %55, %60 : vector<16x32xf32>
      %62 = arith.mulf %61, %61 : vector<16x32xf32>
      %cst_32 = arith.constant dense<0.000000e+00> : vector<16xf32>
      %63 = vector.multi_reduction <add>, %62, %cst_32 [1] : vector<16x32xf32> to vector<16xf32>
      %64 = vector.shape_cast %63 : vector<16xf32> to vector<16x1xf32>
      %cst_33 = arith.constant 3.200000e+01 : f32
      %65 = vector.broadcast %cst_33 : f32 to vector<16x1xf32>
      %66 = arith.divf %64, %65 : vector<16x1xf32>
      %cst_34 = arith.constant 9.99999996E-13 : f32
      %67 = vector.broadcast %cst_34 : f32 to vector<16x1xf32>
      %68 = arith.addf %66, %67 : vector<16x1xf32>
      %69 = math.rsqrt %68 : vector<16x1xf32>
      %70 = vector.broadcast %69 : vector<16x1xf32> to vector<16x32xf32>
      %71 = arith.mulf %61, %70 : vector<16x32xf32>
      %c0_35 = arith.constant 0 : index
      %c0_36 = arith.constant 0 : index
      %72 = vector.load %arg5[%c0_35, %c0_36] : memref<1x32xf32, #tpu.memory_space<vmem>>, vector<1x32xf32>
      %73 = vector.broadcast %72 : vector<1x32xf32> to vector<16x32xf32>
      %74 = arith.mulf %73, %71 : vector<16x32xf32>
      %c0_37 = arith.constant 0 : index
      %c0_38 = arith.constant 0 : index
      %75 = vector.load %arg6[%c0_37, %c0_38] : memref<1x32xf32, #tpu.memory_space<vmem>>, vector<1x32xf32>
      %76 = vector.broadcast %75 : vector<1x32xf32> to vector<16x32xf32>
      %77 = arith.addf %74, %76 : vector<16x32xf32>
      %c0_39 = arith.constant 0 : index
      %c0_40 = arith.constant 0 : index
      %78 = vector.load %arg10[%c0_39, %c0_40] : memref<16x32xf32, #tpu.memory_space<vmem>>, vector<16x32xf32>
      tpu.vector_store %arg10[%c0_39, %c0_40], %77 {strides = array<i32>} : memref<16x32xf32, #tpu.memory_space<vmem>>, vector<16x32xf32>,
    } else {
    }
    %c0 = arith.constant 0 : index
    %c0_1 = arith.constant 0 : index
    %3 = vector.load %arg10[%c0, %c0_1] : memref<16x32xf32, #tpu.memory_space<vmem>>, vector<16x32xf32>
    %c0_2 = arith.constant 0 : index
    %c0_3 = arith.constant 0 : index
    %4 = vector.load %arg7[%c0_2, %c0_3] : memref<32x256xf32, #tpu.memory_space<vmem>>, vector<32x256xf32>
    %cst = arith.constant dense<0.000000e+00> : vector<16x256xf32>
    %5 = tpu.matmul %3, %4, %cst {dimension_numbers = #tpu.dot_dimension_numbers<[1], [0], [0], [1], [0, 0, 1, 1], [], []>} : vector<16x32xf32>, vector<32x256xf32>, vector<16x256xf32> -> vector<16x256xf32>
    %c0_4 = arith.constant 0 : index
    %c0_5 = arith.constant 0 : index
    %6 = vector.load %arg8[%c0_4, %c0_5] : memref<1x256xf32, #tpu.memory_space<vmem>>, vector<1x256xf32>
    %7 = vector.broadcast %6 : vector<1x256xf32> to vector<16x256xf32>
    %8 = arith.addf %5, %7 : vector<16x256xf32>
    %c0_6 = arith.constant 0 : index
    %c0_7 = arith.constant 0 : index
    %9 = vector.load %arg9[%c0_6, %c0_7] : memref<16x256xf32, #tpu.memory_space<vmem>>, vector<16x256xf32>
    tpu.vector_store %arg9[%c0_6, %c0_7], %8 {strides = array<i32>} : memref<16x256xf32, #tpu.memory_space<vmem>>, vector<16x256xf32>,
    return
  }
  func.func @transform_0(%arg0: i32, %arg1: i32) -> (i32, i32) {
    %c0_i32 = arith.constant 0 : i32
    %c0_i32_0 = arith.constant 0 : i32
    return %arg0, %c0_i32 : i32, i32
  }
  func.func @transform_1(%arg0: i32, %arg1: i32) -> (i32, i32) {
    %c0_i32 = arith.constant 0 : i32
    %c0_i32_0 = arith.constant 0 : i32
    %c0_i32_1 = arith.constant 0 : i32
    return %c0_i32, %c0_i32_0 : i32, i32
  }
  func.func @transform_2(%arg0: i32, %arg1: i32) -> (i32, i32) {
    %c0_i32 = arith.constant 0 : i32
    %c0_i32_0 = arith.constant 0 : i32
    %c0_i32_1 = arith.constant 0 : i32
    return %c0_i32, %c0_i32_0 : i32, i32
  }
  func.func @transform_3(%arg0: i32, %arg1: i32) -> (i32, i32) {
    %c0_i32 = arith.constant 0 : i32
    %c0_i32_0 = arith.constant 0 : i32
    %c0_i32_1 = arith.constant 0 : i32
    return %c0_i32, %c0_i32_0 : i32, i32
  }
  func.func @transform_4(%arg0: i32, %arg1: i32) -> (i32, i32) {
    %c0_i32 = arith.constant 0 : i32
    %c0_i32_0 = arith.constant 0 : i32
    %c0_i32_1 = arith.constant 0 : i32
    return %c0_i32, %c0_i32_0 : i32, i32
  }
  func.func @transform_5(%arg0: i32, %arg1: i32) -> (i32, i32) {
    %c0_i32 = arith.constant 0 : i32
    %c0_i32_0 = arith.constant 0 : i32
    return %c0_i32, %arg1 : i32, i32
  }
  func.func @transform_6(%arg0: i32, %arg1: i32) -> (i32, i32) {
    %c0_i32 = arith.constant 0 : i32
    %c0_i32_0 = arith.constant 0 : i32
    return %c0_i32, %arg1 : i32, i32
  }
  func.func @transform_7(%arg0: i32, %arg1: i32) -> (i32, i32) {
    %c0_i32 = arith.constant 0 : i32
    return %arg0, %arg1 : i32, i32
  }
}

module attributes {stable_mosaic.version = 11 : i64} {
  func.func @_lm_head_kernel(%arg0: i32, %arg1: i32, %arg2: memref<16x32xf32, #tpu.memory_space<vmem>>, %arg3: memref<32x32xf32, #tpu.memory_space<vmem>>, %arg4: memref<1x32xf32, #tpu.memory_space<vmem>>, %arg5: memref<1x32xf32, #tpu.memory_space<vmem>>, %arg6: memref<1x32xf32, #tpu.memory_space<vmem>>, %arg7: memref<32x256xf32, #tpu.memory_space<vmem>>, %arg8: memref<1x256xf32, #tpu.memory_space<vmem>>, %arg9: memref<16x256xf32, #tpu.memory_space<vmem>>, %arg10: memref<16x32xf32, #tpu.memory_space<vmem>>) attributes {dimension_semantics = [#tpu.dimension_semantics<parallel>, #tpu.dimension_semantics<arbitrary>], iteration_bounds = array<i64: 2, 1>, scalar_prefetch = 0 : i64, scratch_operands = 1 : i64, tpu.core_type = #tpu.core_type<tc>, window_params = [{transform_indices = @transform_0, window_bounds = array<i64: 16, 32>}, {pipeline_mode = #tpu.pipeline_mode<synchronous>, transform_indices = @transform_1, window_bounds = array<i64: 32, 32>}, {pipeline_mode = #tpu.pipeline_mode<synchronous>, transform_indices = @transform_2, window_bounds = array<i64: 1, 32>}, {pipeline_mode = #tpu.pipeline_mode<synchronous>, transform_indices = @transform_3, window_bounds = array<i64: 1, 32>}, {pipeline_mode = #tpu.pipeline_mode<synchronous>, transform_indices = @transform_4, window_bounds = array<i64: 1, 32>}, {transform_indices = @transform_5, window_bounds = array<i64: 32, 256>}, {transform_indices = @transform_6, window_bounds = array<i64: 1, 256>}, {transform_indices = @transform_7, window_bounds = array<i64: 16, 256>}]} {
    %c0_i32 = arith.constant 0 : i32
    %0 = arith.cmpi eq, %arg1, %c0_i32 : i32
    %1 = arith.extui %0 : i1 to i32
    %c0_i32_0 = arith.constant 0 : i32
    %2 = arith.cmpi ne, %1, %c0_i32_0 : i32
    scf.if %2 {
      %c0_8 = arith.constant 0 : index
      %c0_9 = arith.constant 0 : index
      %10 = vector.load %arg2[%c0_8, %c0_9] : memref<16x32xf32, #tpu.memory_space<vmem>>, vector<16x32xf32>
      %c0_10 = arith.constant 0 : index
      %c0_11 = arith.constant 0 : index
      %11 = vector.load %arg3[%c0_10, %c0_11] : memref<32x32xf32, #tpu.memory_space<vmem>>, vector<32x32xf32>
      %cst_12 = arith.constant dense<0.000000e+00> : vector<16x32xf32>
      %12 = tpu.matmul %10, %11, %cst_12 {dimension_numbers = #tpu.dot_dimension_numbers<[1], [0], [0], [1], [0, 0, 1, 1], [], []>} : vector<16x32xf32>, vector<32x32xf32>, vector<16x32xf32> -> vector<16x32xf32>
      %c0_13 = arith.constant 0 : index
      %c0_14 = arith.constant 0 : index
      %13 = vector.load %arg4[%c0_13, %c0_14] : memref<1x32xf32, #tpu.memory_space<vmem>>, vector<1x32xf32>
      %14 = vector.broadcast %13 : vector<1x32xf32> to vector<16x32xf32>
      %15 = arith.addf %12, %14 : vector<16x32xf32>
      %cst_15 = arith.constant 5.000000e-01 : f32
      %16 = vector.broadcast %cst_15 : f32 to vector<16x32xf32>
      %17 = arith.mulf %15, %16 : vector<16x32xf32>
      %cst_16 = arith.constant 0.707106769 : f32
      %18 = vector.broadcast %cst_16 : f32 to vector<16x32xf32>
      %19 = arith.mulf %15, %18 : vector<16x32xf32>
      %20 = math.absf %19 : vector<16x32xf32>
      %cst_17 = arith.constant 0.327591091 : f32
      %21 = vector.broadcast %cst_17 : f32 to vector<16x32xf32>
      %22 = arith.mulf %21, %20 : vector<16x32xf32>
      %cst_18 = arith.constant 1.000000e+00 : f32
      %23 = vector.broadcast %cst_18 : f32 to vector<16x32xf32>
      %24 = arith.addf %23, %22 : vector<16x32xf32>
      %cst_19 = arith.constant 1.000000e+00 : f32
      %25 = vector.broadcast %cst_19 : f32 to vector<16x32xf32>
      %26 = arith.divf %25, %24 : vector<16x32xf32>
      %cst_20 = arith.constant 1.06140542 : f32
      %27 = vector.broadcast %cst_20 : f32 to vector<16x32xf32>
      %28 = arith.mulf %27, %26 : vector<16x32xf32>
      %cst_21 = arith.constant -1.45315206 : f32
      %29 = vector.broadcast %cst_21 : f32 to vector<16x32xf32>
      %30 = arith.addf %28, %29 : vector<16x32xf32>
      %31 = arith.mulf %30, %26 : vector<16x32xf32>
      %cst_22 = arith.constant 1.42141378 : f32
      %32 = vector.broadcast %cst_22 : f32 to vector<16x32xf32>
      %33 = arith.addf %31, %32 : vector<16x32xf32>
      %34 = arith.mulf %33, %26 : vector<16x32xf32>
      %cst_23 = arith.constant -0.284496725 : f32
      %35 = vector.broadcast %cst_23 : f32 to vector<16x32xf32>
      %36 = arith.addf %34, %35 : vector<16x32xf32>
      %37 = arith.mulf %36, %26 : vector<16x32xf32>
      %cst_24 = arith.constant 0.254829586 : f32
      %38 = vector.broadcast %cst_24 : f32 to vector<16x32xf32>
      %39 = arith.addf %37, %38 : vector<16x32xf32>
      %40 = arith.mulf %39, %26 : vector<16x32xf32>
      %cst_25 = arith.constant 0.000000e+00 : f32
      %41 = vector.broadcast %cst_25 : f32 to vector<16x32xf32>
      %42 = arith.subf %41, %20 : vector<16x32xf32>
      %43 = arith.mulf %42, %20 : vector<16x32xf32>
      %44 = math.exp %43 : vector<16x32xf32>
      %45 = arith.mulf %40, %44 : vector<16x32xf32>
      %cst_26 = arith.constant 1.000000e+00 : f32
      %46 = vector.broadcast %cst_26 : f32 to vector<16x32xf32>
      %47 = arith.subf %46, %45 : vector<16x32xf32>
      %cst_27 = arith.constant 0.000000e+00 : f32
      %48 = vector.broadcast %cst_27 : f32 to vector<16x32xf32>
      %49 = arith.cmpf oge, %19, %48 : vector<16x32xf32>
      %cst_28 = arith.constant 0.000000e+00 : f32
      %50 = vector.broadcast %cst_28 : f32 to vector<16x32xf32>
      %51 = arith.subf %50, %47 : vector<16x32xf32>
      %52 = arith.select %49, %47, %51 : vector<16x32xi1>, vector<16x32xf32>
      %cst_29 = arith.constant 1.000000e+00 : f32
      %53 = vector.broadcast %cst_29 : f32 to vector<16x32xf32>
      %54 = arith.addf %53, %52 : vector<16x32xf32>
      %55 = arith.mulf %17, %54 : vector<16x32xf32>
      %cst_30 = arith.constant dense<0.000000e+00> : vector<16xf32>
      %56 = vector.multi_reduction <add>, %55, %cst_30 [1] : vector<16x32xf32> to vector<16xf32>
      %57 = vector.shape_cast %56 : vector<16xf32> to vector<16x1xf32>
      %cst_31 = arith.constant 3.200000e+01 : f32
      %58 = vector.broadcast %cst_31 : f32 to vector<16x1xf32>
      %59 = arith.divf %57, %58 : vector<16x1xf32>
      %60 = vector.broadcast %59 : vector<16x1xf32> to vector<16x32xf32>
      %61 = arith.subf %55, %60 : vector<16x32xf32>
      %62 = arith.mulf %61, %61 : vector<16x32xf32>
      %cst_32 = arith.constant dense<0.000000e+00> : vector<16xf32>
      %63 = vector.multi_reduction <add>, %62, %cst_32 [1] : vector<16x32xf32> to vector<16xf32>
      %64 = vector.shape_cast %63 : vector<16xf32> to vector<16x1xf32>
      %cst_33 = arith.constant 3.200000e+01 : f32
      %65 = vector.broadcast %cst_33 : f32 to vector<16x1xf32>
      %66 = arith.divf %64, %65 : vector<16x1xf32>
      %cst_34 = arith.constant 9.99999996E-13 : f32
      %67 = vector.broadcast %cst_34 : f32 to vector<16x1xf32>
      %68 = arith.addf %66, %67 : vector<16x1xf32>
      %69 = math.rsqrt %68 : vector<16x1xf32>
      %70 = vector.broadcast %69 : vector<16x1xf32> to vector<16x32xf32>
      %71 = arith.mulf %61, %70 : vector<16x32xf32>
      %c0_35 = arith.constant 0 : index
      %c0_36 = arith.constant 0 : index
      %72 = vector.load %arg5[%c0_35, %c0_36] : memref<1x32xf32, #tpu.memory_space<vmem>>, vector<1x32xf32>
      %73 = vector.broadcast %72 : vector<1x32xf32> to vector<16x32xf32>
      %74 = arith.mulf %73, %71 : vector<16x32xf32>
      %c0_37 = arith.constant 0 : index
      %c0_38 = arith.constant 0 : index
      %75 = vector.load %arg6[%c0_37, %c0_38] : memref<1x32xf32, #tpu.memory_space<vmem>>, vector<1x32xf32>
      %76 = vector.broadcast %75 : vector<1x32xf32> to vector<16x32xf32>
      %77 = arith.addf %74, %76 : vector<16x32xf32>
      %c0_39 = arith.constant 0 : index
      %c0_40 = arith.constant 0 : index
      %78 = vector.load %arg10[%c0_39, %c0_40] : memref<16x32xf32, #tpu.memory_space<vmem>>, vector<16x32xf32>
      tpu.vector_store %arg10[%c0_39, %c0_40], %77 {strides = array<i32>} : memref<16x32xf32, #tpu.memory_space<vmem>>, vector<16x32xf32>,
    } else {
    }
    %c0 = arith.constant 0 : index
    %c0_1 = arith.constant 0 : index
    %3 = vector.load %arg10[%c0, %c0_1] : memref<16x32xf32, #tpu.memory_space<vmem>>, vector<16x32xf32>
    %c0_2 = arith.constant 0 : index
    %c0_3 = arith.constant 0 : index
    %4 = vector.load %arg7[%c0_2, %c0_3] : memref<32x256xf32, #tpu.memory_space<vmem>>, vector<32x256xf32>
    %cst = arith.constant dense<0.000000e+00> : vector<16x256xf32>
    %5 = tpu.matmul %3, %4, %cst {dimension_numbers = #tpu.dot_dimension_numbers<[1], [0], [0], [1], [0, 0, 1, 1], [], []>} : vector<16x32xf32>, vector<32x256xf32>, vector<16x256xf32> -> vector<16x256xf32>
    %c0_4 = arith.constant 0 : index
    %c0_5 = arith.constant 0 : index
    %6 = vector.load %arg8[%c0_4, %c0_5] : memref<1x256xf32, #tpu.memory_space<vmem>>, vector<1x256xf32>
    %7 = vector.broadcast %6 : vector<1x256xf32> to vector<16x256xf32>
    %8 = arith.addf %5, %7 : vector<16x256xf32>
    %c0_6 = arith.constant 0 : index
    %c0_7 = arith.constant 0 : index
    %9 = vector.load %arg9[%c0_6, %c0_7] : memref<16x256xf32, #tpu.memory_space<vmem>>, vector<16x256xf32>
    tpu.vector_store %arg9[%c0_6, %c0_7], %8 {strides = array<i32>} : memref<16x256xf32, #tpu.memory_space<vmem>>, vector<16x256xf32>,
    return
  }
  func.func @transform_0(%arg0: i32, %arg1: i32) -> (i32, i32) {
    %c0_i32 = arith.constant 0 : i32
    %c0_i32_0 = arith.constant 0 : i32
    return %arg0, %c0_i32 : i32, i32
  }
  func.func @transform_1(%arg0: i32, %arg1: i32) -> (i32, i32) {
    %c0_i32 = arith.constant 0 : i32
    %c0_i32_0 = arith.constant 0 : i32
    %c0_i32_1 = arith.constant 0 : i32
    return %c0_i32, %c0_i32_0 : i32, i32
  }
  func.func @transform_2(%arg0: i32, %arg1: i32) -> (i32, i32) {
    %c0_i32 = arith.constant 0 : i32
    %c0_i32_0 = arith.constant 0 : i32
    %c0_i32_1 = arith.constant 0 : i32
    return %c0_i32, %c0_i32_0 : i32, i32
  }
  func.func @transform_3(%arg0: i32, %arg1: i32) -> (i32, i32) {
    %c0_i32 = arith.constant 0 : i32
    %c0_i32_0 = arith.constant 0 : i32
    %c0_i32_1 = arith.constant 0 : i32
    return %c0_i32, %c0_i32_0 : i32, i32
  }
  func.func @transform_4(%arg0: i32, %arg1: i32) -> (i32, i32) {
    %c0_i32 = arith.constant 0 : i32
    %c0_i32_0 = arith.constant 0 : i32
    %c0_i32_1 = arith.constant 0 : i32
    return %c0_i32, %c0_i32_0 : i32, i32
  }
  func.func @transform_5(%arg0: i32, %arg1: i32) -> (i32, i32) {
    %c0_i32 = arith.constant 0 : i32
    %c0_i32_0 = arith.constant 0 : i32
    return %c0_i32, %arg1 : i32, i32
  }
  func.func @transform_6(%arg0: i32, %arg1: i32) -> (i32, i32) {
    %c0_i32 = arith.constant 0 : i32
    %c0_i32_0 = arith.constant 0 : i32
    return %c0_i32, %arg1 : i32, i32
  }
  func.func @transform_7(%arg0: i32, %arg1: i32) -> (i32, i32) {
    %c0_i32 = arith.constant 0 : i32
    return %arg0, %arg1 : i32, i32
  }
}

</mosaic_0001>

<llo_original>
// kernel: tpu_custom_call.1
$region0: #{tpu_custom_call.1}
  #allocation0 [shape = 'u32[]', space=smem, size = 0x4, offset = 0x4, fixed_abs, tag = 'smem constant byte address 0x4 - core index']
  #allocation1 [shape = 'u32[144,128]{1,0:T(1,128)}', space=vmem, size = 0x12000, scoped, tag = 'internal scratch']
  #allocation2 [shape = 'f32[16,32]{1,0:T(8,128)}', space=vmem, size = 0x2000, scoped, tag = 'scratch operand']
  %s0 = inlined_call_operand.hbm [shape: f32[32,32], index: 0, kind: input, shape index: {}]
  %s1 = inlined_call_operand.hbm [shape: f32[32,32], index: 1, kind: input, shape index: {}]
  %s2 = inlined_call_operand.vmem [shape: f32[1,32], index: 2, kind: input, shape index: {}]
  %s3 = inlined_call_operand.vmem [shape: f32[1,32], index: 3, kind: input, shape index: {}]
  %s4 = inlined_call_operand.vmem [shape: f32[1,32], index: 4, kind: input, shape index: {}]
  %s5 = inlined_call_operand.hbm [shape: f32[32,256], index: 5, kind: input, shape index: {}]
  %s6 = inlined_call_operand.vmem [shape: f32[1,256], index: 6, kind: input, shape index: {}]
  %s7 = inlined_call_operand.hbm [shape: f32[32,256], index: 7, kind: output, shape index: {}]
  %s8 = sld [smem:[#allocation0]]
  $region77: #{tpu_custom_call.1} parent=0
    _
  %s10 = ssub.s32 1, %s8
  %s11 = scalar_select 0, %s10, %s8
  $region1: #{tpu_custom_call.1} parent=0
    #allocation3 [shape = 'u8[16384]{0}', space=vmem, size = 0x4000, scoped, tag = 'input window, operand 0']
    #allocation4 [shape = 's32[2]{0}', space=sflag, size = 0x8, scoped, tag = 'scoped memory for tpu_custom_call.1']
    #allocation5 [shape = 's32[2]{0}', space=sflag, size = 0x8, scoped, tag = 'scoped memory for tpu_custom_call.1']
    #allocation6 [shape = 'u8[16384]{0}', space=vmem, size = 0x4000, scoped, tag = 'input window, operand 1, single buffered']
    #allocation7 [shape = 's32[1]{0}', space=sflag, size = 0x4, scoped, tag = 'scoped memory for tpu_custom_call.1']
    #allocation8 [shape = 'u8[32768]{0}', space=vmem, size = 0x8000, scoped, tag = 'input window, operand 5, single buffered']
    #allocation9 [shape = 'u8[32768]{0}', space=vmem, size = 0x8000, scoped, tag = 'output window, operand 0']
    %12 = vsyncpa [#allocation4], 0
    %s13 = scalar_lea.sflag [#allocation4], 1
    %14 = vsyncpa %s13, 0
    %15 = vsyncpa [#allocation7], 0
    %16 = vsyncpa [#allocation5], 0
    %s17 = scalar_lea.sflag [#allocation5], 1
    %18 = vsyncpa %s17, 0
    loop: start=0, step=1, limit=4
    $region2: #{tpu_custom_call.1} parent=1 // loop_pre_header
      _
    $region3: #{tpu_custom_call.1} parent=1 // loop_header
      %s20 = sphi 0, %s24
      %p21 = scmp.ge.s32.totalorder %s20, 4
      %s27 = sphi 0, %s39
      %s28 = sphi 0, %s35
      %s29 = sphi 0, %s27
      %s30 = sphi 0, %s28
      %s31 = sphi 0, %s29
      %s32 = sphi 0, %s30
      %s42 = sphi 0, %s44
      %s45 = sphi 0, %s42
      %s46 = sphi 0, %s45
      %s62 = sphi 0, %s46
      %s66 = sphi 0, %s66
      %s68 = sphi 0, %s66
      %s69 = sphi 0, %s68
      %s83 = sphi 0, %s69
      %s87 = sphi 0, %s87
      %s89 = sphi 0, %s87
      %s90 = sphi 0, %s89
      %s104 = sphi 0, %s90
      %s108 = sphi 0, %s108
      %s110 = sphi 0, %s108
      %s111 = sphi 0, %s110
      %s125 = sphi 0, %s111
      %s129 = sphi 0, %s129
      %s131 = sphi 0, %s129
      %s132 = sphi 0, %s131
      %s146 = sphi 0, %s132
      %s152 = sphi 0, %s154
      %s155 = sphi 0, %s152
      %s156 = sphi 0, %s155
      %s172 = sphi 0, %s156
      %s178 = sphi 0, %s180
      %s181 = sphi 0, %s178
      %s182 = sphi 0, %s181
      %s198 = sphi 0, %s182
      %s206 = sphi 0, %s208
      %s209 = sphi 0, %s206
      %s210 = sphi 0, %s209
      %s226 = sphi 0, %s210
    $region4: #{tpu_custom_call.1} parent=1 // loop_header_branch
      %23 = sbr.rel (%p21) target = $region8
    $region5: #{tpu_custom_call.1} parent=1 // loop_body
      %s25 = ssub.s32 %s20, 1
      %s26 = ssub.s32 %s20, 2
      %s33 = sadd.s32 1, %s28
      %p34 = scmp.ge.s32.totalorder %s33, 1
      %s35 = scalar_select %p34, 0, %s33
      %s36 = sadd.s32 1, %s27
      %s37 = scalar_select %p34, %s36, %s27
      %p38 = scmp.ge.s32.totalorder %s37, 2
      %s39 = scalar_select %p38, 0, %s37
      %s40 = ssub.s32 %s27, %s39
      %p41 = scmp.eq.s32.totalorder %s40, 0
      %s43 = sadd.s32 %s42, 1
      %s44 = scalar_select %p41, %s42, %s43
      %p47 = pneg %p41
      %p48 = scmp.eq.s32.totalorder %s20, 1
      %p49 = por %p47, %p48
      %p50 = scmp.ne.s32.totalorder %s42, %s45
      %p51 = scmp.eq.s32.totalorder %s20, 0
      %p52 = por %p50, %p51
      %p53 = scmp.ne.s32.totalorder %s42, %s45
      %p54 = scmp.eq.s32.totalorder %s25, 1
      %p55 = por %p53, %p54
      %p56 = scmp.ne.s32.totalorder %s45, %s46
      %p57 = scmp.eq.s32.totalorder %s25, 0
      %p58 = por %p56, %p57
      %p59 = scmp.ne.s32.totalorder %s45, %s46
      %p60 = scmp.eq.s32.totalorder %s26, 1
      %p61 = por %p59, %p60
      %p63 = scmp.ne.s32.totalorder %s46, %s62
      %p64 = scmp.eq.s32.totalorder %s26, 0
      %p65 = por %p63, %p64
      %s67 = sadd.s32 %s66, 1
      %p70 = scmp.eq.s32.totalorder %s20, 1
      %p71 = scmp.ne.s32.totalorder %s66, %s68
      %p72 = scmp.eq.s32.totalorder %s20, 0
      %p73 = por %p71, %p72
      %p74 = scmp.ne.s32.totalorder %s66, %s68
      %p75 = scmp.eq.s32.totalorder %s25, 1
      %p76 = por %p74, %p75
      %p77 = scmp.ne.s32.totalorder %s68, %s69
      %p78 = scmp.eq.s32.totalorder %s25, 0
      %p79 = por %p77, %p78
      %p80 = scmp.ne.s32.totalorder %s68, %s69
      %p81 = scmp.eq.s32.totalorder %s26, 1
      %p82 = por %p80, %p81
      %p84 = scmp.ne.s32.totalorder %s69, %s83
      %p85 = scmp.eq.s32.totalorder %s26, 0
      %p86 = por %p84, %p85
      %s88 = sadd.s32 %s87, 1
      %p91 = scmp.eq.s32.totalorder %s20, 1
      %p92 = scmp.ne.s32.totalorder %s87, %s89
      %p93 = scmp.eq.s32.totalorder %s20, 0
      %p94 = por %p92, %p93
      %p95 = scmp.ne.s32.totalorder %s87, %s89
      %p96 = scmp.eq.s32.totalorder %s25, 1
      %p97 = por %p95, %p96
      %p98 = scmp.ne.s32.totalorder %s89, %s90
      %p99 = scmp.eq.s32.totalorder %s25, 0
      %p100 = por %p98, %p99
      %p101 = scmp.ne.s32.totalorder %s89, %s90
      %p102 = scmp.eq.s32.totalorder %s26, 1
      %p103 = por %p101, %p102
      %p105 = scmp.ne.s32.totalorder %s90, %s104
      %p106 = scmp.eq.s32.totalorder %s26, 0
      %p107 = por %p105, %p106
      %s109 = sadd.s32 %s108, 1
      %p112 = scmp.eq.s32.totalorder %s20, 1
      %p113 = scmp.ne.s32.totalorder %s108, %s110
      %p114 = scmp.eq.s32.totalorder %s20, 0
      %p115 = por %p113, %p114
      %p116 = scmp.ne.s32.totalorder %s108, %s110
      %p117 = scmp.eq.s32.totalorder %s25, 1
      %p118 = por %p116, %p117
      %p119 = scmp.ne.s32.totalorder %s110, %s111
      %p120 = scmp.eq.s32.totalorder %s25, 0
      %p121 = por %p119, %p120
      %p122 = scmp.ne.s32.totalorder %s110, %s111
      %p123 = scmp.eq.s32.totalorder %s26, 1
      %p124 = por %p122, %p123
      %p126 = scmp.ne.s32.totalorder %s111, %s125
      %p127 = scmp.eq.s32.totalorder %s26, 0
      %p128 = por %p126, %p127
      %s130 = sadd.s32 %s129, 1
      %p133 = scmp.eq.s32.totalorder %s20, 1
      %p134 = scmp.ne.s32.totalorder %s129, %s131
      %p135 = scmp.eq.s32.totalorder %s20, 0
      %p136 = por %p134, %p135
      %p137 = scmp.ne.s32.totalorder %s129, %s131
      %p138 = scmp.eq.s32.totalorder %s25, 1
      %p139 = por %p137, %p138
      %p140 = scmp.ne.s32.totalorder %s131, %s132
      %p141 = scmp.eq.s32.totalorder %s25, 0
      %p142 = por %p140, %p141
      %p143 = scmp.ne.s32.totalorder %s131, %s132
      %p144 = scmp.eq.s32.totalorder %s26, 1
      %p145 = por %p143, %p144
      %p147 = scmp.ne.s32.totalorder %s132, %s146
      %p148 = scmp.eq.s32.totalorder %s26, 0
      %p149 = por %p147, %p148
      %s150 = ssub.s32 %s28, %s35
      %p151 = scmp.eq.s32.totalorder %s150, 0
      %s153 = sadd.s32 %s152, 1
      %s154 = scalar_select %p151, %s152, %s153
      %p157 = pneg %p151
      %p158 = scmp.eq.s32.totalorder %s20, 1
      %p159 = por %p157, %p158
      %p160 = scmp.ne.s32.totalorder %s152, %s155
      %p161 = scmp.eq.s32.totalorder %s20, 0
      %p162 = por %p160, %p161
      %p163 = scmp.ne.s32.totalorder %s152, %s155
      %p164 = scmp.eq.s32.totalorder %s25, 1
      %p165 = por %p163, %p164
      %p166 = scmp.ne.s32.totalorder %s155, %s156
      %p167 = scmp.eq.s32.totalorder %s25, 0
      %p168 = por %p166, %p167
      %p169 = scmp.ne.s32.totalorder %s155, %s156
      %p170 = scmp.eq.s32.totalorder %s26, 1
      %p171 = por %p169, %p170
      %p173 = scmp.ne.s32.totalorder %s156, %s172
      %p174 = scmp.eq.s32.totalorder %s26, 0
      %p175 = por %p173, %p174
      %s176 = ssub.s32 %s28, %s35
      %p177 = scmp.eq.s32.totalorder %s176, 0
      %s179 = sadd.s32 %s178, 1
      %s180 = scalar_select %p177, %s178, %s179
      %p183 = pneg %p177
      %p184 = scmp.eq.s32.totalorder %s20, 1
      %p185 = por %p183, %p184
      %p186 = scmp.ne.s32.totalorder %s178, %s181
      %p187 = scmp.eq.s32.totalorder %s20, 0
      %p188 = por %p186, %p187
      %p189 = scmp.ne.s32.totalorder %s178, %s181
      %p190 = scmp.eq.s32.totalorder %s25, 1
      %p191 = por %p189, %p190
      %p192 = scmp.ne.s32.totalorder %s181, %s182
      %p193 = scmp.eq.s32.totalorder %s25, 0
      %p194 = por %p192, %p193
      %p195 = scmp.ne.s32.totalorder %s181, %s182
      %p196 = scmp.eq.s32.totalorder %s26, 1
      %p197 = por %p195, %p196
      %p199 = scmp.ne.s32.totalorder %s182, %s198
      %p200 = scmp.eq.s32.totalorder %s26, 0
      %p201 = por %p199, %p200
      %s202 = ssub.s32 %s27, %s39
      %s203 = ssub.s32 %s28, %s35
      %s204 = sor.u32 %s202, %s203
      %p205 = scmp.eq.s32.totalorder %s204, 0
      %s207 = sadd.s32 %s206, 1
      %s208 = scalar_select %p205, %s206, %s207
      %p211 = pneg %p205
      %p212 = scmp.eq.s32.totalorder %s20, 1
      %p213 = por %p211, %p212
      %p214 = scmp.ne.s32.totalorder %s206, %s209
      %p215 = scmp.eq.s32.totalorder %s20, 0
      %p216 = por %p214, %p215
      %p217 = scmp.ne.s32.totalorder %s206, %s209
      %p218 = scmp.eq.s32.totalorder %s25, 1
      %p219 = por %p217, %p218
      %p220 = scmp.ne.s32.totalorder %s209, %s210
      %p221 = scmp.eq.s32.totalorder %s25, 0
      %p222 = por %p220, %p221
      %p223 = scmp.ne.s32.totalorder %s209, %s210
      %p224 = scmp.eq.s32.totalorder %s26, 1
      %p225 = por %p223, %p224
      %p227 = scmp.ne.s32.totalorder %s210, %s226
      %p228 = scmp.eq.s32.totalorder %s26, 0
      %p229 = por %p227, %p228
      %p230 = scmp.le.s32.totalorder 1, %s20
      %p231 = scmp.lt.s32.totalorder %s20, 3
      %p232 = pnand %p230, %p231
      %p233 = pneg %p232
      // Predicated region
      $region9: #{tpu_custom_call.1} parent=5 // pred_check
        _
      $region10: #{tpu_custom_call.1} parent=5 // pred_check_branch
        %235 = sbr.rel (%p232) target = $region12
      $region11: #{tpu_custom_call.1} parent=5 // pred_region
        %s236 = ssub.s32 %s20, 1
        // Predicated region
        $region13: #{tpu_custom_call.1} parent=11 // pred_check
          %p237 = pneg %p79
        $region14: #{tpu_custom_call.1} parent=11 // pred_check_branch
          %239 = sbr.rel (%p237) target = $region16
        $region15: #{tpu_custom_call.1} parent=11 // pred_region
          %s241 = ssub.s32 512, 512
          %242 = vsyncadd [#allocation7], %s241
          %s243 = sshll.u32 [#allocation6], 4
          %s244 = int_to_ptr.vmem [resolvable:$true] %s243
          %249 = dma.hbm_to_vmem [thread:$0]  %s1, 512, %s244, [#allocation7], 128, 128, 8
        $region16: #{tpu_custom_call.1} parent=11 // pred_fallthru
          _
        // Predicated region
        $region17: #{tpu_custom_call.1} parent=11 // pred_check
          %p250 = pneg %p100
        $region18: #{tpu_custom_call.1} parent=11 // pred_check_branch
          %252 = sbr.rel (%p250) target = $region20
        $region19: #{tpu_custom_call.1} parent=11 // pred_region
          _
        $region20: #{tpu_custom_call.1} parent=11 // pred_fallthru
          _
        // Predicated region
        $region21: #{tpu_custom_call.1} parent=11 // pred_check
          %p253 = pneg %p121
        $region22: #{tpu_custom_call.1} parent=11 // pred_check_branch
          %255 = sbr.rel (%p253) target = $region24
        $region23: #{tpu_custom_call.1} parent=11 // pred_region
          _
        $region24: #{tpu_custom_call.1} parent=11 // pred_fallthru
          _
        // Predicated region
        $region25: #{tpu_custom_call.1} parent=11 // pred_check
          %p256 = pneg %p142
        $region26: #{tpu_custom_call.1} parent=11 // pred_check_branch
          %258 = sbr.rel (%p256) target = $region28
        $region27: #{tpu_custom_call.1} parent=11 // pred_region
          _
        $region28: #{tpu_custom_call.1} parent=11 // pred_fallthru
          _
        // Predicated region
        $region29: #{tpu_custom_call.1} parent=11 // pred_check
          %p259 = pneg %p168
        $region30: #{tpu_custom_call.1} parent=11 // pred_check_branch
          %261 = sbr.rel (%p259) target = $region32
        $region31: #{tpu_custom_call.1} parent=11 // pred_region
          %s262 = smul.u32 2, %s30
          %s264 = ssub.s32 1024, 1024
          %265 = vsyncadd [#allocation7], %s264
          %s266 = smul.addr %s262, 128
          %s267 = scalar_lea.hbm %s5, %s266
          %s268 = sshll.u32 [#allocation8], 4
          %s269 = int_to_ptr.vmem [resolvable:$true] %s268
          %274 = dma.hbm_to_vmem [thread:$0]  %s267, 1024, %s269, [#allocation7], 256, 256, 16
        $region32: #{tpu_custom_call.1} parent=11 // pred_fallthru
          _
        // Predicated region
        $region33: #{tpu_custom_call.1} parent=11 // pred_check
          %p275 = pneg %p194
        $region34: #{tpu_custom_call.1} parent=11 // pred_check_branch
          %277 = sbr.rel (%p275) target = $region36
        $region35: #{tpu_custom_call.1} parent=11 // pred_region
          %s278 = smul.u32 2, %s30
          %p279 = scmp.lt.s32.totalorder %s278, 1
          %s280 = scalar_select %p279, %s278, 1
          %s281 = scalar_lea.vmem %s6, %s280
          %s282 = smul.u32 2, %s30
        $region36: #{tpu_custom_call.1} parent=11 // pred_fallthru
          _
      $region12: #{tpu_custom_call.1} parent=5 // pred_fallthru
        _
      %p283 = scmp.lt.s32.totalorder %s20, 2
      // Predicated region
      $region37: #{tpu_custom_call.1} parent=5 // pred_check
        %p284 = pneg %p283
      $region38: #{tpu_custom_call.1} parent=5 // pred_check_branch
        %286 = sbr.rel (%p284) target = $region40
      $region39: #{tpu_custom_call.1} parent=5 // pred_region
        // Predicated region
        $region41: #{tpu_custom_call.1} parent=39 // pred_check
          %p287 = pneg %p52
        $region42: #{tpu_custom_call.1} parent=39 // pred_check_branch
          %289 = sbr.rel (%p287) target = $region44
        $region43: #{tpu_custom_call.1} parent=39 // pred_region
          %s290 = sand.u32 %s42, 1
          %s291 = scalar_lea.sflag [#allocation4], %s290
          %s292 = sand.u32 %s42, 1
          %s293 = smul.addr %s292, 16
          %s294 = scalar_lea.vmem [#allocation3], %s293
          %s295 = smul.u32 2, %s27
          %s297 = ssub.s32 256, 256
          %298 = vsyncadd %s291, %s297
          %s299 = smul.addr %s295, 128
          %s300 = scalar_lea.hbm %s0, %s299
          %s301 = sshll.u32 %s294, 4
          %s302 = int_to_ptr.vmem [resolvable:$true] %s301
          %307 = dma.hbm_to_vmem [thread:$0]  %s300, 256, %s302, %s291, 128, 128, 8
        $region44: #{tpu_custom_call.1} parent=39 // pred_fallthru
          _
      $region40: #{tpu_custom_call.1} parent=5 // pred_fallthru
        _
      %p308 = scmp.le.s32.totalorder 1, %s20
      %p309 = scmp.lt.s32.totalorder %s20, 3
      %p310 = pnand %p308, %p309
      %p311 = pneg %p310
      // Predicated region
      $region45: #{tpu_custom_call.1} parent=5 // pred_check
        _
      $region46: #{tpu_custom_call.1} parent=5 // pred_check_branch
        %313 = sbr.rel (%p310) target = $region48
      $region47: #{tpu_custom_call.1} parent=5 // pred_region
        %s314 = ssub.s32 %s20, 1
        %s315 = sand.u32 %s45, 1
        %s316 = scalar_lea.sflag [#allocation4], %s315
        %s317 = sand.u32 %s45, 1
        %s318 = smul.addr %s317, 16
        %s319 = scalar_lea.vmem [#allocation3], %s318
        // Predicated region
        $region49: #{tpu_custom_call.1} parent=47 // pred_check
          %p320 = pneg %p58
        $region50: #{tpu_custom_call.1} parent=47 // pred_check_branch
          %322 = sbr.rel (%p320) target = $region52
        $region51: #{tpu_custom_call.1} parent=47 // pred_region
          %323 = dma.done %s316, 256
        $region52: #{tpu_custom_call.1} parent=47 // pred_fallthru
          _
        // Predicated region
        $region53: #{tpu_custom_call.1} parent=47 // pred_check
          %p324 = pneg %p79
        $region54: #{tpu_custom_call.1} parent=47 // pred_check_branch
          %326 = sbr.rel (%p324) target = $region56
        $region55: #{tpu_custom_call.1} parent=47 // pred_region
          %327 = dma.done [#allocation7], 512
        $region56: #{tpu_custom_call.1} parent=47 // pred_fallthru
          _
        // Predicated region
        $region57: #{tpu_custom_call.1} parent=47 // pred_check
          %p328 = pneg %p168
        $region58: #{tpu_custom_call.1} parent=47 // pred_check_branch
          %330 = sbr.rel (%p328) target = $region60
        $region59: #{tpu_custom_call.1} parent=47 // pred_region
          %331 = dma.done [#allocation7], 1024
        $region60: #{tpu_custom_call.1} parent=47 // pred_fallthru
          _
        %s332 = sand.u32 %s45, 1
        %s333 = scalar_lea.sflag [#allocation4], %s332
        %s334 = sand.u32 %s45, 1
        %s335 = smul.addr %s334, 16
        %s336 = scalar_lea.vmem [#allocation3], %s335
        %p337 = pneg %p58
        %p338 = pneg %p55
        %p339 = pneg %p79
        %p340 = pneg %p76
        %p341 = pneg %p100
        %p342 = pneg %p97
        %p343 = pneg %p121
        %p344 = pneg %p118
        %p345 = pneg %p142
        %p346 = pneg %p139
        %p347 = pneg %p168
        %p348 = pneg %p165
        %s349 = smul.u32 2, %s30
        %p350 = scmp.lt.s32.totalorder %s349, 1
        %s351 = scalar_select %p350, %s349, 1
        %s352 = scalar_lea.vmem %s6, %s351
        %p353 = pneg %p194
        %p354 = pneg %p191
        %p355 = pneg %p222
        %p356 = pneg %p219
        %s357 = sand.u32 %s209, 1
        %s358 = scalar_lea.sflag [#allocation5], %s357
        %s359 = sand.u32 %s209, 1
        %s360 = smul.addr %s359, 32
        %s361 = scalar_lea.vmem [#allocation9], %s360
        %s362 = smul.u32 2, %s29
        %s363 = smul.u32 2, %s30
        %s364 = smul.u32 2, %s30
        %p365 = scmp.lt.s32.totalorder %s364, 1
        %s366 = scalar_select %p365, %s364, 1
        %s367 = scalar_lea.vmem %s6, %s366
        %s368 = smul.u32 2, %s30
        %s369 = smul.u32 2, %s29
        %s370 = smul.u32 2, %s30
        %p371 = scmp.eq.s32.totalorder %s30, 0
        // Predicated region
        $region61: #{tpu_custom_call.1} parent=47 // pred_check
          %p372 = pneg %p371
        $region62: #{tpu_custom_call.1} parent=47 // pred_check_branch
          %374 = sbr.rel (%p372) target = $region64
        $region63: #{tpu_custom_call.1} parent=47 // pred_region
          %v375 = vld [vmem:[%s319] sm:$0xff]
          %v376 = vld [vmem:[%s319 + $0x8] sm:$0xff]
          %v377 = vld [vmem:[#allocation6] sm:$0xff]
          %v378 = vld [vmem:[#allocation6 + $0x8] sm:$0xff]
          %v379 = vld [vmem:[#allocation6 + $0x10] sm:$0xff]
          %v380 = vld [vmem:[#allocation6 + $0x18] sm:$0xff]
          %v381 = vld [vmem:[%s2] sm:$0x1]
          %v383 = vlaneseq
          %v384 = vshrl.u32 %v383, 7
          %v385 = vsub.s32 0, %v384
          %v386 = vrot.slane %v381, %v385
          %vm388 = vcmask 261120
          %v390 = vsel %vm388, %v375, 0
          %v393 = vsel %vm388, %v376, 0
          %395 = vmatprep.subr.mxu0 0.0
          %396 = vmatpush1.msra.mxu0 %v377
          %397 = vmatprep.subr.mxu0 0.0
          %398 = vmatpush1.msra.mxu0 %v378
          %399 = vmatprep.subr.mxu0 0.0
          %400 = vmatpush1.msra.mxu0 %v379
          %401 = vmatprep.subr.mxu0 0.0
          %402 = vmatpush1.msra.mxu0 %v380
          %403 = vmatprep.subr.mxu0 0.0
          %404 = vmatpush1.msra.mxu0 0.0
          %405 = vmatprep.subr.mxu0 0.0
          %406 = vmatpush1.msra.mxu0 0.0
          %407 = vmatprep.subr.mxu0 0.0
          %408 = vmatpush1.msra.mxu0 0.0
          %409 = vmatprep.subr.mxu0 0.0
          %410 = vmatpush1.msra.mxu0 0.0
          %411 = vmatprep.subr.mxu0 0.0
          %412 = vmatpush1.msra.mxu0 0.0
          %413 = vmatprep.subr.mxu0 0.0
          %414 = vmatpush1.msra.mxu0 0.0
          %415 = vmatprep.subr.mxu0 0.0
          %416 = vmatpush1.msra.mxu0 0.0
          %417 = vmatprep.subr.mxu0 0.0
          %418 = vmatpush1.msra.mxu0 0.0
          %419 = vmatprep.subr.mxu0 0.0
          %420 = vmatpush1.msra.mxu0 0.0
          %421 = vmatprep.subr.mxu0 0.0
          %422 = vmatpush1.msra.mxu0 0.0
          %423 = vmatprep.subr.mxu0 0.0
          %424 = vmatpush1.msra.mxu0 0.0
          %425 = vmatprep.subr.mxu0 0.0
          %426 = vmatpush1.msra.mxu0 0.0
          %427 = vmatprep.subr.mxu0 0.0
          %428 = vmatpush1.msra.mxu0 0.0
          %429 = vmatprep.subr.mxu0 0.0
          %430 = vmatpush1.msra.mxu0 0.0
          %431 = vmatprep.subr.mxu0 0.0
          %432 = vmatpush1.msra.mxu0 0.0
          %433 = vmatprep.subr.mxu0 0.0
          %434 = vmatpush1.msra.mxu0 0.0
          %435 = vmatprep.subr.mxu0 0.0
          %436 = vmatpush1.msra.mxu0 0.0
          %437 = vmatprep.subr.mxu0 0.0
          %438 = vmatpush1.msra.mxu0 0.0
          %439 = vmatprep.subr.mxu0 0.0
          %440 = vmatpush1.msra.mxu0 0.0
          %441 = vmatprep.subr.mxu0 0.0
          %442 = vmatpush1.msra.mxu0 0.0
          %443 = vmatprep.subr.mxu0 0.0
          %444 = vmatpush1.msra.mxu0 0.0
          %445 = vmatprep.subr.mxu0 0.0
          %446 = vmatpush1.msra.mxu0 0.0
          %447 = vmatprep.subr.mxu0 0.0
          %448 = vmatpush1.msra.mxu0 0.0
          %449 = vmatprep.subr.mxu0 0.0
          %450 = vmatpush1.msra.mxu0 0.0
          %451 = vmatprep.subr.mxu0 0.0
          %452 = vmatpush1.msra.mxu0 0.0
          %453 = vmatprep.subr.mxu0 0.0
          %454 = vmatpush1.msra.mxu0 0.0
          %455 = vmatprep.subr.mxu0 0.0
          %456 = vmatpush1.msra.mxu0 0.0
          %457 = vmatprep.subr.mxu0 0.0
          %458 = vmatpush1.msra.mxu0 0.0
          %459 = vmatprep.mubr.f32.mxu0 0.0
          %460 = vmatmul.mubr.f32.gmra.mrb[0].mxu0 %v390
          %v461 = vpop.f32.mrb[0].mxu0
          %v462 = vadd.f32 %v386, %v461
          %v463 = vpop.f32.mrb[0].mxu0
          %464 = vmatprep.mubr.f32.mxu0 0.0
          %465 = vmatmul.mubr.f32.gmra.mrb[0].mxu0 %v393
          %v466 = vpop.f32.mrb[0].mxu0
          %v467 = vadd.f32 %v386, %v466
          %v468 = vpop.f32.mrb[0].mxu0
          %469 = vdwg.mxu0
          %v470 = vmul.f32 %v462, 0.5
          %v471 = vmul.f32 %v467, 0.5
          %v472 = vmul.f32 %v462, 0.70710677
          %v473 = vmul.f32 %v467, 0.70710677
          %v474 = vand.u32 2147483647, %v472
          %v475 = vand.u32 2147483647, %v473
          %v476 = vmul.f32 %v474, 0.3275911
          %v477 = vmul.f32 %v475, 0.3275911
          %v478 = vadd.f32 %v476, 1.0
          %v479 = vadd.f32 %v477, 1.0
          %v480 = vrcp.pop %v478
          %v481 = vmul.f32 1.0, %v480
          %v482 = vrcp.pop %v479
          %v483 = vmul.f32 1.0, %v482
          %v484 = vmul.f32 %v481, 1.0614054
          %v485 = vmul.f32 %v483, 1.0614054
          %v486 = vadd.f32 %v484, -1.4531521
          %v487 = vadd.f32 %v485, -1.4531521
          %v488 = vmul.f32 %v486, %v481
          %v489 = vmul.f32 %v487, %v483
          %v490 = vadd.f32 %v488, 1.4214138
          %v491 = vadd.f32 %v489, 1.4214138
          %v492 = vmul.f32 %v490, %v481
          %v493 = vmul.f32 %v491, %v483
          %v494 = vadd.f32 %v492, -0.28449672
          %v495 = vadd.f32 %v493, -0.28449672
          %v496 = vmul.f32 %v494, %v481
          %v497 = vmul.f32 %v495, %v483
          %v498 = vadd.f32 %v496, 0.2548296
          %v499 = vadd.f32 %v497, 0.2548296
          %v500 = vmul.f32 %v498, %v481
          %v501 = vmul.f32 %v499, %v483
          %v502 = vsub.f32 0.0, %v474
          %v503 = vsub.f32 0.0, %v475
          %v504 = vmul.f32 %v502, %v474
          %v505 = vmul.f32 %v503, %v475
          %v506 = vmul.f32 %v504, 1.442695
          %v507 = vpow.pop %v506
          %v508 = vmul.f32 %v505, 1.442695
          %v509 = vpow.pop %v508
          %v510 = vmul.f32 %v500, %v507
          %v511 = vmul.f32 %v501, %v509
          %v512 = vsub.f32 1.0, %v510
          %v513 = vsub.f32 1.0, %v511
          %vm514 = vcmp.ge.f32.partialorder %v472, 0.0
          %vm515 = vcmp.ge.f32.partialorder %v473, 0.0
          %v516 = vsub.f32 0.0, %v512
          %v517 = vsub.f32 0.0, %v513
          %v518 = vsel %vm514, %v512, %v516
          %v519 = vsel %vm515, %v513, %v517
          %v520 = vadd.f32 %v518, 1.0
          %v521 = vadd.f32 %v519, 1.0
          %v522 = vmul.f32 %v470, %v520
          %v523 = vmul.f32 %v471, %v521
          %v524 = vsel %vm388, %v522, 0.0
          %525 = vadd.xlane.f32.xlu0 %v524
          %v526 = vpop.xlane.xlu0 %525
          %v527 = vsel %vm388, %v523, 0.0
          %528 = vadd.xlane.f32.xlu0 %v527
          %v529 = vpop.xlane.xlu0 %528
          %v530 = vrcp.pop 32.0
          %v531 = vmul.f32 %v526, %v530
          %v532 = vmul.f32 %v529, %v530
          %v533 = vsub.f32 %v522, %v531
          %v534 = vsub.f32 %v523, %v532
          %v535 = vmul.f32 %v533, %v533
          %v536 = vmul.f32 %v534, %v534
          %v537 = vsel %vm388, %v535, 0.0
          %538 = vadd.xlane.f32.xlu0 %v537
          %v539 = vpop.xlane.xlu0 %538
          %v540 = vsel %vm388, %v536, 0.0
          %541 = vadd.xlane.f32.xlu0 %v540
          %v542 = vpop.xlane.xlu0 %541
          %v543 = vmul.f32 %v539, %v530
          %v544 = vmul.f32 %v542, %v530
          %v545 = vadd.f32 %v543, 1e-12
          %v546 = vadd.f32 %v544, 1e-12
          %v547 = vrsqrt.pop %v545
          %v548 = vrsqrt.pop %v546
          %v549 = vmul.f32 %v533, %v547
          %v550 = vmul.f32 %v534, %v548
          %v551 = vld [vmem:[%s3] sm:$0x1]
          %v553 = vlaneseq
          %v554 = vshrl.u32 %v553, 7
          %v555 = vsub.s32 0, %v554
          %v556 = vrot.slane %v551, %v555
          %v558 = vmul.f32 %v556, %v549
          %v559 = vmul.f32 %v556, %v550
          %v560 = vld [vmem:[%s4] sm:$0x1]
          %v562 = vlaneseq
          %v563 = vshrl.u32 %v562, 7
          %v564 = vsub.s32 0, %v563
          %v565 = vrot.slane %v560, %v564
          %v567 = vadd.f32 %v558, %v565
          %v568 = vadd.f32 %v559, %v565
          %569 = vst.msk [vmem:[#allocation2] sm:$0xff] %vm388, %v567
          %570 = vst.msk [vmem:[#allocation2 + $0x8] sm:$0xff] %vm388, %v568
        $region64: #{tpu_custom_call.1} parent=47 // pred_fallthru
          _
        %v571 = vld [vmem:[#allocation2] sm:$0xff]
        %v572 = vld [vmem:[#allocation2 + $0x8] sm:$0xff]
        %v573 = vld [vmem:[#allocation8] sm:$0xff]
        %v574 = vld [vmem:[#allocation8 + $0x8] sm:$0xff]
        %v575 = vld [vmem:[#allocation8 + $0x10] sm:$0xff]
        %v576 = vld [vmem:[#allocation8 + $0x18] sm:$0xff]
        %v577 = vld [vmem:[#allocation8 + $0x20] sm:$0xff]
        %v578 = vld [vmem:[#allocation8 + $0x28] sm:$0xff]
        %v579 = vld [vmem:[#allocation8 + $0x30] sm:$0xff]
        %v580 = vld [vmem:[#allocation8 + $0x38] sm:$0xff]
        %v581 = vld [vmem:[%s367] sm:$0x3]
        %v583 = vlaneseq
        %v584 = vshrl.u32 %v583, 7
        %v585 = vsub.s32 0, %v584
        %v586 = vrot.slane %v581, %v585
        %v587 = vlaneseq
        %v588 = vshrl.u32 %v587, 7
        %v589 = vsub.s32 1, %v588
        %v590 = vrot.slane %v581, %v589
        %vm593 = vcmask 261120
        %v595 = vsel %vm593, %v571, 0
        %v598 = vsel %vm593, %v572, 0
        %600 = vmatprep.subr.mxu0 %v574
        %601 = vmatpush1.msra.mxu0 %v573
        %602 = vmatprep.subr.mxu0 %v576
        %603 = vmatpush1.msra.mxu0 %v575
        %604 = vmatprep.subr.mxu0 %v578
        %605 = vmatpush1.msra.mxu0 %v577
        %606 = vmatprep.subr.mxu0 %v580
        %607 = vmatpush1.msra.mxu0 %v579
        %608 = vmatprep.subr.mxu0 0.0
        %609 = vmatpush1.msra.mxu0 0.0
        %610 = vmatprep.subr.mxu0 0.0
        %611 = vmatpush1.msra.mxu0 0.0
        %612 = vmatprep.subr.mxu0 0.0
        %613 = vmatpush1.msra.mxu0 0.0
        %614 = vmatprep.subr.mxu0 0.0
        %615 = vmatpush1.msra.mxu0 0.0
        %616 = vmatprep.subr.mxu0 0.0
        %617 = vmatpush1.msra.mxu0 0.0
        %618 = vmatprep.subr.mxu0 0.0
        %619 = vmatpush1.msra.mxu0 0.0
        %620 = vmatprep.subr.mxu0 0.0
        %621 = vmatpush1.msra.mxu0 0.0
        %622 = vmatprep.subr.mxu0 0.0
        %623 = vmatpush1.msra.mxu0 0.0
        %624 = vmatprep.subr.mxu0 0.0
        %625 = vmatpush1.msra.mxu0 0.0
        %626 = vmatprep.subr.mxu0 0.0
        %627 = vmatpush1.msra.mxu0 0.0
        %628 = vmatprep.subr.mxu0 0.0
        %629 = vmatpush1.msra.mxu0 0.0
        %630 = vmatprep.subr.mxu0 0.0
        %631 = vmatpush1.msra.mxu0 0.0
        %632 = vmatprep.subr.mxu0 0.0
        %633 = vmatpush1.msra.mxu0 0.0
        %634 = vmatprep.subr.mxu0 0.0
        %635 = vmatpush1.msra.mxu0 0.0
        %636 = vmatprep.subr.mxu0 0.0
        %637 = vmatpush1.msra.mxu0 0.0
        %638 = vmatprep.subr.mxu0 0.0
        %639 = vmatpush1.msra.mxu0 0.0
        %640 = vmatprep.subr.mxu0 0.0
        %641 = vmatpush1.msra.mxu0 0.0
        %642 = vmatprep.subr.mxu0 0.0
        %643 = vmatpush1.msra.mxu0 0.0
        %644 = vmatprep.subr.mxu0 0.0
        %645 = vmatpush1.msra.mxu0 0.0
        %646 = vmatprep.subr.mxu0 0.0
        %647 = vmatpush1.msra.mxu0 0.0
        %648 = vmatprep.subr.mxu0 0.0
        %649 = vmatpush1.msra.mxu0 0.0
        %650 = vmatprep.subr.mxu0 0.0
        %651 = vmatpush1.msra.mxu0 0.0
        %652 = vmatprep.subr.mxu0 0.0
        %653 = vmatpush1.msra.mxu0 0.0
        %654 = vmatprep.subr.mxu0 0.0
        %655 = vmatpush1.msra.mxu0 0.0
        %656 = vmatprep.subr.mxu0 0.0
        %657 = vmatpush1.msra.mxu0 0.0
        %658 = vmatprep.subr.mxu0 0.0
        %659 = vmatpush1.msra.mxu0 0.0
        %660 = vmatprep.subr.mxu0 0.0
        %661 = vmatpush1.msra.mxu0 0.0
        %662 = vmatprep.subr.mxu0 0.0
        %663 = vmatpush1.msra.mxu0 0.0
        %664 = vmatprep.mubr.f32.mxu0 0.0
        %665 = vmatmul.mubr.f32.gmra.mrb[0].mxu0 %v595
        %v666 = vpop.f32.mrb[0].mxu0
        %v667 = vadd.f32 %v586, %v666
        %v668 = vpop.f32.mrb[0].mxu0
        %v669 = vadd.f32 %v590, %v668
        %670 = vmatprep.mubr.f32.mxu0 0.0
        %671 = vmatmul.mubr.f32.gmra.mrb[0].mxu0 %v598
        %v672 = vpop.f32.mrb[0].mxu0
        %v673 = vadd.f32 %v586, %v672
        %v674 = vpop.f32.mrb[0].mxu0
        %v675 = vadd.f32 %v590, %v674
        %676 = vdwg.mxu0
        %677 = vst [vmem:[%s361] sm:$0xff] %v667
        %678 = vst [vmem:[%s361 + $0x8] sm:$0xff] %v669
        %679 = vst [vmem:[%s361 + $0x10] sm:$0xff] %v673
        %680 = vst [vmem:[%s361 + $0x18] sm:$0xff] %v675
        %s681 = sand.u32 %s209, 1
        %s682 = scalar_lea.sflag [#allocation5], %s681
        %s683 = sand.u32 %s209, 1
        %s684 = smul.addr %s683, 32
        %s685 = scalar_lea.vmem [#allocation9], %s684
        // Predicated region
        $region65: #{tpu_custom_call.1} parent=47 // pred_check
          %p686 = pneg %p219
        $region66: #{tpu_custom_call.1} parent=47 // pred_check_branch
          %688 = sbr.rel (%p686) target = $region68
        $region67: #{tpu_custom_call.1} parent=47 // pred_region
          %s689 = smul.u32 2, %s29
          %s690 = smul.u32 2, %s30
          %s692 = ssub.s32 512, 512
          %693 = vsyncadd %s682, %s692
          %s694 = smul.addr %s689, 2
          %s695 = sadd.s32 %s690, %s694
          %s696 = smul.addr %s695, 128
          %s697 = scalar_lea.hbm %s7, %s696
          %s698 = sshll.u32 %s685, 4
          %s699 = int_to_ptr.vmem [resolvable:$true] %s698
          %704 = dma.vmem_to_hbm [thread:$0]  %s699, 512, %s697, %s682, 256, 256, 16
        $region68: #{tpu_custom_call.1} parent=47 // pred_fallthru
          _
      $region48: #{tpu_custom_call.1} parent=5 // pred_fallthru
        _
      %p705 = scmp.le.s32.totalorder 2, %s20
      // Predicated region
      $region69: #{tpu_custom_call.1} parent=5 // pred_check
        %p706 = pneg %p705
      $region70: #{tpu_custom_call.1} parent=5 // pred_check_branch
        %708 = sbr.rel (%p706) target = $region72
      $region71: #{tpu_custom_call.1} parent=5 // pred_region
        %s709 = ssub.s32 %s20, 2
        // Predicated region
        $region73: #{tpu_custom_call.1} parent=71 // pred_check
          %p710 = pneg %p225
        $region74: #{tpu_custom_call.1} parent=71 // pred_check_branch
          %712 = sbr.rel (%p710) target = $region76
        $region75: #{tpu_custom_call.1} parent=71 // pred_region
          %s713 = sand.u32 %s210, 1
          %s714 = scalar_lea.sflag [#allocation5], %s713
          %s715 = sand.u32 %s210, 1
          %s716 = smul.addr %s715, 32
          %s717 = scalar_lea.vmem [#allocation9], %s716
          %718 = dma.done %s714, 512
        $region76: #{tpu_custom_call.1} parent=71 // pred_fallthru
          _
      $region72: #{tpu_custom_call.1} parent=5 // pred_fallthru
        _
    $region6: #{tpu_custom_call.1} parent=1 // loop_footer
      %s24 = sadd.s32 1, %s20
    $region7: #{tpu_custom_call.1} parent=1 // loop_footer_branch
      %19 = sbr.rel target = $region3
    $region8: #{tpu_custom_call.1} parent=1 // loop_exit
      _
    %719 = vsyncpa [#allocation4], 1
    %s720 = scalar_lea.sflag [#allocation4], 1
    %721 = vsyncpa %s720, 1
    %722 = vsyncpa [#allocation7], 1
    %723 = vsyncpa [#allocation5], 1
    %s724 = scalar_lea.sflag [#allocation5], 1
    %725 = vsyncpa %s724, 1

// kernel: tpu_custom_call.1
$region0: #{tpu_custom_call.1}
  #allocation0 [shape = 'u32[]', space=smem, size = 0x4, offset = 0x4, fixed_abs, tag = 'smem constant byte address 0x4 - core index']
  #allocation1 [shape = 'u32[144,128]{1,0:T(1,128)}', space=vmem, size = 0x12000, scoped, tag = 'internal scratch']
  #allocation2 [shape = 'f32[16,32]{1,0:T(8,128)}', space=vmem, size = 0x2000, scoped, tag = 'scratch operand']
  %s0 = inlined_call_operand.hbm [shape: f32[32,32], index: 0, kind: input, shape index: {}]
  %s1 = inlined_call_operand.hbm [shape: f32[32,32], index: 1, kind: input, shape index: {}]
  %s2 = inlined_call_operand.vmem [shape: f32[1,32], index: 2, kind: input, shape index: {}]
  %s3 = inlined_call_operand.vmem [shape: f32[1,32], index: 3, kind: input, shape index: {}]
  %s4 = inlined_call_operand.vmem [shape: f32[1,32], index: 4, kind: input, shape index: {}]
  %s5 = inlined_call_operand.hbm [shape: f32[32,256], index: 5, kind: input, shape index: {}]
  %s6 = inlined_call_operand.vmem [shape: f32[1,256], index: 6, kind: input, shape index: {}]
  %s7 = inlined_call_operand.hbm [shape: f32[32,256], index: 7, kind: output, shape index: {}]
  %s8 = sld [smem:[#allocation0]]
  $region77: #{tpu_custom_call.1} parent=0
    _
  %s10 = ssub.s32 1, %s8
  %s11 = scalar_select 0, %s10, %s8
  $region1: #{tpu_custom_call.1} parent=0
    #allocation3 [shape = 'u8[16384]{0}', space=vmem, size = 0x4000, scoped, tag = 'input window, operand 0']
    #allocation4 [shape = 's32[2]{0}', space=sflag, size = 0x8, scoped, tag = 'scoped memory for tpu_custom_call.1']
    #allocation5 [shape = 's32[2]{0}', space=sflag, size = 0x8, scoped, tag = 'scoped memory for tpu_custom_call.1']
    #allocation6 [shape = 'u8[16384]{0}', space=vmem, size = 0x4000, scoped, tag = 'input window, operand 1, single buffered']
    #allocation7 [shape = 's32[1]{0}', space=sflag, size = 0x4, scoped, tag = 'scoped memory for tpu_custom_call.1']
    #allocation8 [shape = 'u8[32768]{0}', space=vmem, size = 0x8000, scoped, tag = 'input window, operand 5, single buffered']
    #allocation9 [shape = 'u8[32768]{0}', space=vmem, size = 0x8000, scoped, tag = 'output window, operand 0']
    %12 = vsyncpa [#allocation4], 0
    %s13 = scalar_lea.sflag [#allocation4], 1
    %14 = vsyncpa %s13, 0
    %15 = vsyncpa [#allocation7], 0
    %16 = vsyncpa [#allocation5], 0
    %s17 = scalar_lea.sflag [#allocation5], 1
    %18 = vsyncpa %s17, 0
    loop: start=0, step=1, limit=4
    $region2: #{tpu_custom_call.1} parent=1 // loop_pre_header
      _
    $region3: #{tpu_custom_call.1} parent=1 // loop_header
      %s20 = sphi 0, %s24
      %p21 = scmp.ge.s32.totalorder %s20, 4
      %s27 = sphi 0, %s39
      %s28 = sphi 0, %s35
      %s29 = sphi 0, %s27
      %s30 = sphi 0, %s28
      %s31 = sphi 0, %s29
      %s32 = sphi 0, %s30
      %s42 = sphi 0, %s44
      %s45 = sphi 0, %s42
      %s46 = sphi 0, %s45
      %s62 = sphi 0, %s46
      %s66 = sphi 0, %s66
      %s68 = sphi 0, %s66
      %s69 = sphi 0, %s68
      %s83 = sphi 0, %s69
      %s87 = sphi 0, %s87
      %s89 = sphi 0, %s87
      %s90 = sphi 0, %s89
      %s104 = sphi 0, %s90
      %s108 = sphi 0, %s108
      %s110 = sphi 0, %s108
      %s111 = sphi 0, %s110
      %s125 = sphi 0, %s111
      %s129 = sphi 0, %s129
      %s131 = sphi 0, %s129
      %s132 = sphi 0, %s131
      %s146 = sphi 0, %s132
      %s152 = sphi 0, %s154
      %s155 = sphi 0, %s152
      %s156 = sphi 0, %s155
      %s172 = sphi 0, %s156
      %s178 = sphi 0, %s180
      %s181 = sphi 0, %s178
      %s182 = sphi 0, %s181
      %s198 = sphi 0, %s182
      %s206 = sphi 0, %s208
      %s209 = sphi 0, %s206
      %s210 = sphi 0, %s209
      %s226 = sphi 0, %s210
    $region4: #{tpu_custom_call.1} parent=1 // loop_header_branch
      %23 = sbr.rel (%p21) target = $region8
    $region5: #{tpu_custom_call.1} parent=1 // loop_body
      %s25 = ssub.s32 %s20, 1
      %s26 = ssub.s32 %s20, 2
      %s33 = sadd.s32 1, %s28
      %p34 = scmp.ge.s32.totalorder %s33, 1
      %s35 = scalar_select %p34, 0, %s33
      %s36 = sadd.s32 1, %s27
      %s37 = scalar_select %p34, %s36, %s27
      %p38 = scmp.ge.s32.totalorder %s37, 2
      %s39 = scalar_select %p38, 0, %s37
      %s40 = ssub.s32 %s27, %s39
      %p41 = scmp.eq.s32.totalorder %s40, 0
      %s43 = sadd.s32 %s42, 1
      %s44 = scalar_select %p41, %s42, %s43
      %p47 = pneg %p41
      %p48 = scmp.eq.s32.totalorder %s20, 1
      %p49 = por %p47, %p48
      %p50 = scmp.ne.s32.totalorder %s42, %s45
      %p51 = scmp.eq.s32.totalorder %s20, 0
      %p52 = por %p50, %p51
      %p53 = scmp.ne.s32.totalorder %s42, %s45
      %p54 = scmp.eq.s32.totalorder %s25, 1
      %p55 = por %p53, %p54
      %p56 = scmp.ne.s32.totalorder %s45, %s46
      %p57 = scmp.eq.s32.totalorder %s25, 0
      %p58 = por %p56, %p57
      %p59 = scmp.ne.s32.totalorder %s45, %s46
      %p60 = scmp.eq.s32.totalorder %s26, 1
      %p61 = por %p59, %p60
      %p63 = scmp.ne.s32.totalorder %s46, %s62
      %p64 = scmp.eq.s32.totalorder %s26, 0
      %p65 = por %p63, %p64
      %s67 = sadd.s32 %s66, 1
      %p70 = scmp.eq.s32.totalorder %s20, 1
      %p71 = scmp.ne.s32.totalorder %s66, %s68
      %p72 = scmp.eq.s32.totalorder %s20, 0
      %p73 = por %p71, %p72
      %p74 = scmp.ne.s32.totalorder %s66, %s68
      %p75 = scmp.eq.s32.totalorder %s25, 1
      %p76 = por %p74, %p75
      %p77 = scmp.ne.s32.totalorder %s68, %s69
      %p78 = scmp.eq.s32.totalorder %s25, 0
      %p79 = por %p77, %p78
      %p80 = scmp.ne.s32.totalorder %s68, %s69
      %p81 = scmp.eq.s32.totalorder %s26, 1
      %p82 = por %p80, %p81
      %p84 = scmp.ne.s32.totalorder %s69, %s83
      %p85 = scmp.eq.s32.totalorder %s26, 0
      %p86 = por %p84, %p85
      %s88 = sadd.s32 %s87, 1
      %p91 = scmp.eq.s32.totalorder %s20, 1
      %p92 = scmp.ne.s32.totalorder %s87, %s89
      %p93 = scmp.eq.s32.totalorder %s20, 0
      %p94 = por %p92, %p93
      %p95 = scmp.ne.s32.totalorder %s87, %s89
      %p96 = scmp.eq.s32.totalorder %s25, 1
      %p97 = por %p95, %p96
      %p98 = scmp.ne.s32.totalorder %s89, %s90
      %p99 = scmp.eq.s32.totalorder %s25, 0
      %p100 = por %p98, %p99
      %p101 = scmp.ne.s32.totalorder %s89, %s90
      %p102 = scmp.eq.s32.totalorder %s26, 1
      %p103 = por %p101, %p102
      %p105 = scmp.ne.s32.totalorder %s90, %s104
      %p106 = scmp.eq.s32.totalorder %s26, 0
      %p107 = por %p105, %p106
      %s109 = sadd.s32 %s108, 1
      %p112 = scmp.eq.s32.totalorder %s20, 1
      %p113 = scmp.ne.s32.totalorder %s108, %s110
      %p114 = scmp.eq.s32.totalorder %s20, 0
      %p115 = por %p113, %p114
      %p116 = scmp.ne.s32.totalorder %s108, %s110
      %p117 = scmp.eq.s32.totalorder %s25, 1
      %p118 = por %p116, %p117
      %p119 = scmp.ne.s32.totalorder %s110, %s111
      %p120 = scmp.eq.s32.totalorder %s25, 0
      %p121 = por %p119, %p120
      %p122 = scmp.ne.s32.totalorder %s110, %s111
      %p123 = scmp.eq.s32.totalorder %s26, 1
      %p124 = por %p122, %p123
      %p126 = scmp.ne.s32.totalorder %s111, %s125
      %p127 = scmp.eq.s32.totalorder %s26, 0
      %p128 = por %p126, %p127
      %s130 = sadd.s32 %s129, 1
      %p133 = scmp.eq.s32.totalorder %s20, 1
      %p134 = scmp.ne.s32.totalorder %s129, %s131
      %p135 = scmp.eq.s32.totalorder %s20, 0
      %p136 = por %p134, %p135
      %p137 = scmp.ne.s32.totalorder %s129, %s131
      %p138 = scmp.eq.s32.totalorder %s25, 1
      %p139 = por %p137, %p138
      %p140 = scmp.ne.s32.totalorder %s131, %s132
      %p141 = scmp.eq.s32.totalorder %s25, 0
      %p142 = por %p140, %p141
      %p143 = scmp.ne.s32.totalorder %s131, %s132
      %p144 = scmp.eq.s32.totalorder %s26, 1
      %p145 = por %p143, %p144
      %p147 = scmp.ne.s32.totalorder %s132, %s146
      %p148 = scmp.eq.s32.totalorder %s26, 0
      %p149 = por %p147, %p148
      %s150 = ssub.s32 %s28, %s35
      %p151 = scmp.eq.s32.totalorder %s150, 0
      %s153 = sadd.s32 %s152, 1
      %s154 = scalar_select %p151, %s152, %s153
      %p157 = pneg %p151
      %p158 = scmp.eq.s32.totalorder %s20, 1
      %p159 = por %p157, %p158
      %p160 = scmp.ne.s32.totalorder %s152, %s155
      %p161 = scmp.eq.s32.totalorder %s20, 0
      %p162 = por %p160, %p161
      %p163 = scmp.ne.s32.totalorder %s152, %s155
      %p164 = scmp.eq.s32.totalorder %s25, 1
      %p165 = por %p163, %p164
      %p166 = scmp.ne.s32.totalorder %s155, %s156
      %p167 = scmp.eq.s32.totalorder %s25, 0
      %p168 = por %p166, %p167
      %p169 = scmp.ne.s32.totalorder %s155, %s156
      %p170 = scmp.eq.s32.totalorder %s26, 1
      %p171 = por %p169, %p170
      %p173 = scmp.ne.s32.totalorder %s156, %s172
      %p174 = scmp.eq.s32.totalorder %s26, 0
      %p175 = por %p173, %p174
      %s176 = ssub.s32 %s28, %s35
      %p177 = scmp.eq.s32.totalorder %s176, 0
      %s179 = sadd.s32 %s178, 1
      %s180 = scalar_select %p177, %s178, %s179
      %p183 = pneg %p177
      %p184 = scmp.eq.s32.totalorder %s20, 1
      %p185 = por %p183, %p184
      %p186 = scmp.ne.s32.totalorder %s178, %s181
      %p187 = scmp.eq.s32.totalorder %s20, 0
      %p188 = por %p186, %p187
      %p189 = scmp.ne.s32.totalorder %s178, %s181
      %p190 = scmp.eq.s32.totalorder %s25, 1
      %p191 = por %p189, %p190
      %p192 = scmp.ne.s32.totalorder %s181, %s182
      %p193 = scmp.eq.s32.totalorder %s25, 0
      %p194 = por %p192, %p193
      %p195 = scmp.ne.s32.totalorder %s181, %s182
      %p196 = scmp.eq.s32.totalorder %s26, 1
      %p197 = por %p195, %p196
      %p199 = scmp.ne.s32.totalorder %s182, %s198
      %p200 = scmp.eq.s32.totalorder %s26, 0
      %p201 = por %p199, %p200
      %s202 = ssub.s32 %s27, %s39
      %s203 = ssub.s32 %s28, %s35
      %s204 = sor.u32 %s202, %s203
      %p205 = scmp.eq.s32.totalorder %s204, 0
      %s207 = sadd.s32 %s206, 1
      %s208 = scalar_select %p205, %s206, %s207
      %p211 = pneg %p205
      %p212 = scmp.eq.s32.totalorder %s20, 1
      %p213 = por %p211, %p212
      %p214 = scmp.ne.s32.totalorder %s206, %s209
      %p215 = scmp.eq.s32.totalorder %s20, 0
      %p216 = por %p214, %p215
      %p217 = scmp.ne.s32.totalorder %s206, %s209
      %p218 = scmp.eq.s32.totalorder %s25, 1
      %p219 = por %p217, %p218
      %p220 = scmp.ne.s32.totalorder %s209, %s210
      %p221 = scmp.eq.s32.totalorder %s25, 0
      %p222 = por %p220, %p221
      %p223 = scmp.ne.s32.totalorder %s209, %s210
      %p224 = scmp.eq.s32.totalorder %s26, 1
      %p225 = por %p223, %p224
      %p227 = scmp.ne.s32.totalorder %s210, %s226
      %p228 = scmp.eq.s32.totalorder %s26, 0
      %p229 = por %p227, %p228
      %p230 = scmp.le.s32.totalorder 1, %s20
      %p231 = scmp.lt.s32.totalorder %s20, 3
      %p232 = pnand %p230, %p231
      %p233 = pneg %p232
      // Predicated region
      $region9: #{tpu_custom_call.1} parent=5 // pred_check
        _
      $region10: #{tpu_custom_call.1} parent=5 // pred_check_branch
        %235 = sbr.rel (%p232) target = $region12
      $region11: #{tpu_custom_call.1} parent=5 // pred_region
        %s236 = ssub.s32 %s20, 1
        // Predicated region
        $region13: #{tpu_custom_call.1} parent=11 // pred_check
          %p237 = pneg %p79
        $region14: #{tpu_custom_call.1} parent=11 // pred_check_branch
          %239 = sbr.rel (%p237) target = $region16
        $region15: #{tpu_custom_call.1} parent=11 // pred_region
          %s241 = ssub.s32 512, 512
          %242 = vsyncadd [#allocation7], %s241
          %s243 = sshll.u32 [#allocation6], 4
          %s244 = int_to_ptr.vmem [resolvable:$true] %s243
          %249 = dma.hbm_to_vmem [thread:$0]  %s1, 512, %s244, [#allocation7], 128, 128, 8
        $region16: #{tpu_custom_call.1} parent=11 // pred_fallthru
          _
        // Predicated region
        $region17: #{tpu_custom_call.1} parent=11 // pred_check
          %p250 = pneg %p100
        $region18: #{tpu_custom_call.1} parent=11 // pred_check_branch
          %252 = sbr.rel (%p250) target = $region20
        $region19: #{tpu_custom_call.1} parent=11 // pred_region
          _
        $region20: #{tpu_custom_call.1} parent=11 // pred_fallthru
          _
        // Predicated region
        $region21: #{tpu_custom_call.1} parent=11 // pred_check
          %p253 = pneg %p121
        $region22: #{tpu_custom_call.1} parent=11 // pred_check_branch
          %255 = sbr.rel (%p253) target = $region24
        $region23: #{tpu_custom_call.1} parent=11 // pred_region
          _
        $region24: #{tpu_custom_call.1} parent=11 // pred_fallthru
          _
        // Predicated region
        $region25: #{tpu_custom_call.1} parent=11 // pred_check
          %p256 = pneg %p142
        $region26: #{tpu_custom_call.1} parent=11 // pred_check_branch
          %258 = sbr.rel (%p256) target = $region28
        $region27: #{tpu_custom_call.1} parent=11 // pred_region
          _
        $region28: #{tpu_custom_call.1} parent=11 // pred_fallthru
          _
        // Predicated region
        $region29: #{tpu_custom_call.1} parent=11 // pred_check
          %p259 = pneg %p168
        $region30: #{tpu_custom_call.1} parent=11 // pred_check_branch
          %261 = sbr.rel (%p259) target = $region32
        $region31: #{tpu_custom_call.1} parent=11 // pred_region
          %s262 = smul.u32 2, %s30
          %s264 = ssub.s32 1024, 1024
          %265 = vsyncadd [#allocation7], %s264
          %s266 = smul.addr %s262, 128
          %s267 = scalar_lea.hbm %s5, %s266
          %s268 = sshll.u32 [#allocation8], 4
          %s269 = int_to_ptr.vmem [resolvable:$true] %s268
          %274 = dma.hbm_to_vmem [thread:$0]  %s267, 1024, %s269, [#allocation7], 256, 256, 16
        $region32: #{tpu_custom_call.1} parent=11 // pred_fallthru
          _
        // Predicated region
        $region33: #{tpu_custom_call.1} parent=11 // pred_check
          %p275 = pneg %p194
        $region34: #{tpu_custom_call.1} parent=11 // pred_check_branch
          %277 = sbr.rel (%p275) target = $region36
        $region35: #{tpu_custom_call.1} parent=11 // pred_region
          %s278 = smul.u32 2, %s30
          %p279 = scmp.lt.s32.totalorder %s278, 1
          %s280 = scalar_select %p279, %s278, 1
          %s281 = scalar_lea.vmem %s6, %s280
          %s282 = smul.u32 2, %s30
        $region36: #{tpu_custom_call.1} parent=11 // pred_fallthru
          _
      $region12: #{tpu_custom_call.1} parent=5 // pred_fallthru
        _
      %p283 = scmp.lt.s32.totalorder %s20, 2
      // Predicated region
      $region37: #{tpu_custom_call.1} parent=5 // pred_check
        %p284 = pneg %p283
      $region38: #{tpu_custom_call.1} parent=5 // pred_check_branch
        %286 = sbr.rel (%p284) target = $region40
      $region39: #{tpu_custom_call.1} parent=5 // pred_region
        // Predicated region
        $region41: #{tpu_custom_call.1} parent=39 // pred_check
          %p287 = pneg %p52
        $region42: #{tpu_custom_call.1} parent=39 // pred_check_branch
          %289 = sbr.rel (%p287) target = $region44
        $region43: #{tpu_custom_call.1} parent=39 // pred_region
          %s290 = sand.u32 %s42, 1
          %s291 = scalar_lea.sflag [#allocation4], %s290
          %s292 = sand.u32 %s42, 1
          %s293 = smul.addr %s292, 16
          %s294 = scalar_lea.vmem [#allocation3], %s293
          %s295 = smul.u32 2, %s27
          %s297 = ssub.s32 256, 256
          %298 = vsyncadd %s291, %s297
          %s299 = smul.addr %s295, 128
          %s300 = scalar_lea.hbm %s0, %s299
          %s301 = sshll.u32 %s294, 4
          %s302 = int_to_ptr.vmem [resolvable:$true] %s301
          %307 = dma.hbm_to_vmem [thread:$0]  %s300, 256, %s302, %s291, 128, 128, 8
        $region44: #{tpu_custom_call.1} parent=39 // pred_fallthru
          _
      $region40: #{tpu_custom_call.1} parent=5 // pred_fallthru
        _
      %p308 = scmp.le.s32.totalorder 1, %s20
      %p309 = scmp.lt.s32.totalorder %s20, 3
      %p310 = pnand %p308, %p309
      %p311 = pneg %p310
      // Predicated region
      $region45: #{tpu_custom_call.1} parent=5 // pred_check
        _
      $region46: #{tpu_custom_call.1} parent=5 // pred_check_branch
        %313 = sbr.rel (%p310) target = $region48
      $region47: #{tpu_custom_call.1} parent=5 // pred_region
        %s314 = ssub.s32 %s20, 1
        %s315 = sand.u32 %s45, 1
        %s316 = scalar_lea.sflag [#allocation4], %s315
        %s317 = sand.u32 %s45, 1
        %s318 = smul.addr %s317, 16
        %s319 = scalar_lea.vmem [#allocation3], %s318
        // Predicated region
        $region49: #{tpu_custom_call.1} parent=47 // pred_check
          %p320 = pneg %p58
        $region50: #{tpu_custom_call.1} parent=47 // pred_check_branch
          %322 = sbr.rel (%p320) target = $region52
        $region51: #{tpu_custom_call.1} parent=47 // pred_region
          %323 = dma.done %s316, 256
        $region52: #{tpu_custom_call.1} parent=47 // pred_fallthru
          _
        // Predicated region
        $region53: #{tpu_custom_call.1} parent=47 // pred_check
          %p324 = pneg %p79
        $region54: #{tpu_custom_call.1} parent=47 // pred_check_branch
          %326 = sbr.rel (%p324) target = $region56
        $region55: #{tpu_custom_call.1} parent=47 // pred_region
          %327 = dma.done [#allocation7], 512
        $region56: #{tpu_custom_call.1} parent=47 // pred_fallthru
          _
        // Predicated region
        $region57: #{tpu_custom_call.1} parent=47 // pred_check
          %p328 = pneg %p168
        $region58: #{tpu_custom_call.1} parent=47 // pred_check_branch
          %330 = sbr.rel (%p328) target = $region60
        $region59: #{tpu_custom_call.1} parent=47 // pred_region
          %331 = dma.done [#allocation7], 1024
        $region60: #{tpu_custom_call.1} parent=47 // pred_fallthru
          _
        %s332 = sand.u32 %s45, 1
        %s333 = scalar_lea.sflag [#allocation4], %s332
        %s334 = sand.u32 %s45, 1
        %s335 = smul.addr %s334, 16
        %s336 = scalar_lea.vmem [#allocation3], %s335
        %p337 = pneg %p58
        %p338 = pneg %p55
        %p339 = pneg %p79
        %p340 = pneg %p76
        %p341 = pneg %p100
        %p342 = pneg %p97
        %p343 = pneg %p121
        %p344 = pneg %p118
        %p345 = pneg %p142
        %p346 = pneg %p139
        %p347 = pneg %p168
        %p348 = pneg %p165
        %s349 = smul.u32 2, %s30
        %p350 = scmp.lt.s32.totalorder %s349, 1
        %s351 = scalar_select %p350, %s349, 1
        %s352 = scalar_lea.vmem %s6, %s351
        %p353 = pneg %p194
        %p354 = pneg %p191
        %p355 = pneg %p222
        %p356 = pneg %p219
        %s357 = sand.u32 %s209, 1
        %s358 = scalar_lea.sflag [#allocation5], %s357
        %s359 = sand.u32 %s209, 1
        %s360 = smul.addr %s359, 32
        %s361 = scalar_lea.vmem [#allocation9], %s360
        %s362 = smul.u32 2, %s29
        %s363 = smul.u32 2, %s30
        %s364 = smul.u32 2, %s30
        %p365 = scmp.lt.s32.totalorder %s364, 1
        %s366 = scalar_select %p365, %s364, 1
        %s367 = scalar_lea.vmem %s6, %s366
        %s368 = smul.u32 2, %s30
        %s369 = smul.u32 2, %s29
        %s370 = smul.u32 2, %s30
        %p371 = scmp.eq.s32.totalorder %s30, 0
        // Predicated region
        $region61: #{tpu_custom_call.1} parent=47 // pred_check
          %p372 = pneg %p371
        $region62: #{tpu_custom_call.1} parent=47 // pred_check_branch
          %374 = sbr.rel (%p372) target = $region64
        $region63: #{tpu_custom_call.1} parent=47 // pred_region
          %v375 = vld [vmem:[%s319] sm:$0xff]
          %v376 = vld [vmem:[%s319 + $0x8] sm:$0xff]
          %v377 = vld [vmem:[#allocation6] sm:$0xff]
          %v378 = vld [vmem:[#allocation6 + $0x8] sm:$0xff]
          %v379 = vld [vmem:[#allocation6 + $0x10] sm:$0xff]
          %v380 = vld [vmem:[#allocation6 + $0x18] sm:$0xff]
          %v381 = vld [vmem:[%s2] sm:$0x1]
          %v383 = vlaneseq
          %v384 = vshrl.u32 %v383, 7
          %v385 = vsub.s32 0, %v384
          %v386 = vrot.slane %v381, %v385
          %vm388 = vcmask 261120
          %v390 = vsel %vm388, %v375, 0
          %v393 = vsel %vm388, %v376, 0
          %395 = vmatprep.subr.mxu0 0.0
          %396 = vmatpush1.msra.mxu0 %v377
          %397 = vmatprep.subr.mxu0 0.0
          %398 = vmatpush1.msra.mxu0 %v378
          %399 = vmatprep.subr.mxu0 0.0
          %400 = vmatpush1.msra.mxu0 %v379
          %401 = vmatprep.subr.mxu0 0.0
          %402 = vmatpush1.msra.mxu0 %v380
          %403 = vmatprep.subr.mxu0 0.0
          %404 = vmatpush1.msra.mxu0 0.0
          %405 = vmatprep.subr.mxu0 0.0
          %406 = vmatpush1.msra.mxu0 0.0
          %407 = vmatprep.subr.mxu0 0.0
          %408 = vmatpush1.msra.mxu0 0.0
          %409 = vmatprep.subr.mxu0 0.0
          %410 = vmatpush1.msra.mxu0 0.0
          %411 = vmatprep.subr.mxu0 0.0
          %412 = vmatpush1.msra.mxu0 0.0
          %413 = vmatprep.subr.mxu0 0.0
          %414 = vmatpush1.msra.mxu0 0.0
          %415 = vmatprep.subr.mxu0 0.0
          %416 = vmatpush1.msra.mxu0 0.0
          %417 = vmatprep.subr.mxu0 0.0
          %418 = vmatpush1.msra.mxu0 0.0
          %419 = vmatprep.subr.mxu0 0.0
          %420 = vmatpush1.msra.mxu0 0.0
          %421 = vmatprep.subr.mxu0 0.0
          %422 = vmatpush1.msra.mxu0 0.0
          %423 = vmatprep.subr.mxu0 0.0
          %424 = vmatpush1.msra.mxu0 0.0
          %425 = vmatprep.subr.mxu0 0.0
          %426 = vmatpush1.msra.mxu0 0.0
          %427 = vmatprep.subr.mxu0 0.0
          %428 = vmatpush1.msra.mxu0 0.0
          %429 = vmatprep.subr.mxu0 0.0
          %430 = vmatpush1.msra.mxu0 0.0
          %431 = vmatprep.subr.mxu0 0.0
          %432 = vmatpush1.msra.mxu0 0.0
          %433 = vmatprep.subr.mxu0 0.0
          %434 = vmatpush1.msra.mxu0 0.0
          %435 = vmatprep.subr.mxu0 0.0
          %436 = vmatpush1.msra.mxu0 0.0
          %437 = vmatprep.subr.mxu0 0.0
          %438 = vmatpush1.msra.mxu0 0.0
          %439 = vmatprep.subr.mxu0 0.0
          %440 = vmatpush1.msra.mxu0 0.0
          %441 = vmatprep.subr.mxu0 0.0
          %442 = vmatpush1.msra.mxu0 0.0
          %443 = vmatprep.subr.mxu0 0.0
          %444 = vmatpush1.msra.mxu0 0.0
          %445 = vmatprep.subr.mxu0 0.0
          %446 = vmatpush1.msra.mxu0 0.0
          %447 = vmatprep.subr.mxu0 0.0
          %448 = vmatpush1.msra.mxu0 0.0
          %449 = vmatprep.subr.mxu0 0.0
          %450 = vmatpush1.msra.mxu0 0.0
          %451 = vmatprep.subr.mxu0 0.0
          %452 = vmatpush1.msra.mxu0 0.0
          %453 = vmatprep.subr.mxu0 0.0
          %454 = vmatpush1.msra.mxu0 0.0
          %455 = vmatprep.subr.mxu0 0.0
          %456 = vmatpush1.msra.mxu0 0.0
          %457 = vmatprep.subr.mxu0 0.0
          %458 = vmatpush1.msra.mxu0 0.0
          %459 = vmatprep.mubr.f32.mxu0 0.0
          %460 = vmatmul.mubr.f32.gmra.mrb[0].mxu0 %v390
          %v461 = vpop.f32.mrb[0].mxu0
          %v462 = vadd.f32 %v386, %v461
          %v463 = vpop.f32.mrb[0].mxu0
          %464 = vmatprep.mubr.f32.mxu0 0.0
          %465 = vmatmul.mubr.f32.gmra.mrb[0].mxu0 %v393
          %v466 = vpop.f32.mrb[0].mxu0
          %v467 = vadd.f32 %v386, %v466
          %v468 = vpop.f32.mrb[0].mxu0
          %469 = vdwg.mxu0
          %v470 = vmul.f32 %v462, 0.5
          %v471 = vmul.f32 %v467, 0.5
          %v472 = vmul.f32 %v462, 0.70710677
          %v473 = vmul.f32 %v467, 0.70710677
          %v474 = vand.u32 2147483647, %v472
          %v475 = vand.u32 2147483647, %v473
          %v476 = vmul.f32 %v474, 0.3275911
          %v477 = vmul.f32 %v475, 0.3275911
          %v478 = vadd.f32 %v476, 1.0
          %v479 = vadd.f32 %v477, 1.0
          %v480 = vrcp.pop %v478
          %v481 = vmul.f32 1.0, %v480
          %v482 = vrcp.pop %v479
          %v483 = vmul.f32 1.0, %v482
          %v484 = vmul.f32 %v481, 1.0614054
          %v485 = vmul.f32 %v483, 1.0614054
          %v486 = vadd.f32 %v484, -1.4531521
          %v487 = vadd.f32 %v485, -1.4531521
          %v488 = vmul.f32 %v486, %v481
          %v489 = vmul.f32 %v487, %v483
          %v490 = vadd.f32 %v488, 1.4214138
          %v491 = vadd.f32 %v489, 1.4214138
          %v492 = vmul.f32 %v490, %v481
          %v493 = vmul.f32 %v491, %v483
          %v494 = vadd.f32 %v492, -0.28449672
          %v495 = vadd.f32 %v493, -0.28449672
          %v496 = vmul.f32 %v494, %v481
          %v497 = vmul.f32 %v495, %v483
          %v498 = vadd.f32 %v496, 0.2548296
          %v499 = vadd.f32 %v497, 0.2548296
          %v500 = vmul.f32 %v498, %v481
          %v501 = vmul.f32 %v499, %v483
          %v502 = vsub.f32 0.0, %v474
          %v503 = vsub.f32 0.0, %v475
          %v504 = vmul.f32 %v502, %v474
          %v505 = vmul.f32 %v503, %v475
          %v506 = vmul.f32 %v504, 1.442695
          %v507 = vpow.pop %v506
          %v508 = vmul.f32 %v505, 1.442695
          %v509 = vpow.pop %v508
          %v510 = vmul.f32 %v500, %v507
          %v511 = vmul.f32 %v501, %v509
          %v512 = vsub.f32 1.0, %v510
          %v513 = vsub.f32 1.0, %v511
          %vm514 = vcmp.ge.f32.partialorder %v472, 0.0
          %vm515 = vcmp.ge.f32.partialorder %v473, 0.0
          %v516 = vsub.f32 0.0, %v512
          %v517 = vsub.f32 0.0, %v513
          %v518 = vsel %vm514, %v512, %v516
          %v519 = vsel %vm515, %v513, %v517
          %v520 = vadd.f32 %v518, 1.0
          %v521 = vadd.f32 %v519, 1.0
          %v522 = vmul.f32 %v470, %v520
          %v523 = vmul.f32 %v471, %v521
          %v524 = vsel %vm388, %v522, 0.0
          %525 = vadd.xlane.f32.xlu0 %v524
          %v526 = vpop.xlane.xlu0 %525
          %v527 = vsel %vm388, %v523, 0.0
          %528 = vadd.xlane.f32.xlu0 %v527
          %v529 = vpop.xlane.xlu0 %528
          %v530 = vrcp.pop 32.0
          %v531 = vmul.f32 %v526, %v530
          %v532 = vmul.f32 %v529, %v530
          %v533 = vsub.f32 %v522, %v531
          %v534 = vsub.f32 %v523, %v532
          %v535 = vmul.f32 %v533, %v533
          %v536 = vmul.f32 %v534, %v534
          %v537 = vsel %vm388, %v535, 0.0
          %538 = vadd.xlane.f32.xlu0 %v537
          %v539 = vpop.xlane.xlu0 %538
          %v540 = vsel %vm388, %v536, 0.0
          %541 = vadd.xlane.f32.xlu0 %v540
          %v542 = vpop.xlane.xlu0 %541
          %v543 = vmul.f32 %v539, %v530
          %v544 = vmul.f32 %v542, %v530
          %v545 = vadd.f32 %v543, 1e-12
          %v546 = vadd.f32 %v544, 1e-12
          %v547 = vrsqrt.pop %v545
          %v548 = vrsqrt.pop %v546
          %v549 = vmul.f32 %v533, %v547
          %v550 = vmul.f32 %v534, %v548
          %v551 = vld [vmem:[%s3] sm:$0x1]
          %v553 = vlaneseq
          %v554 = vshrl.u32 %v553, 7
          %v555 = vsub.s32 0, %v554
          %v556 = vrot.slane %v551, %v555
          %v558 = vmul.f32 %v556, %v549
          %v559 = vmul.f32 %v556, %v550
          %v560 = vld [vmem:[%s4] sm:$0x1]
          %v562 = vlaneseq
          %v563 = vshrl.u32 %v562, 7
          %v564 = vsub.s32 0, %v563
          %v565 = vrot.slane %v560, %v564
          %v567 = vadd.f32 %v558, %v565
          %v568 = vadd.f32 %v559, %v565
          %569 = vst.msk [vmem:[#allocation2] sm:$0xff] %vm388, %v567
          %570 = vst.msk [vmem:[#allocation2 + $0x8] sm:$0xff] %vm388, %v568
        $region64: #{tpu_custom_call.1} parent=47 // pred_fallthru
          _
        %v571 = vld [vmem:[#allocation2] sm:$0xff]
        %v572 = vld [vmem:[#allocation2 + $0x8] sm:$0xff]
        %v573 = vld [vmem:[#allocation8] sm:$0xff]
        %v574 = vld [vmem:[#allocation8 + $0x8] sm:$0xff]
        %v575 = vld [vmem:[#allocation8 + $0x10] sm:$0xff]
        %v576 = vld [vmem:[#allocation8 + $0x18] sm:$0xff]
        %v577 = vld [vmem:[#allocation8 + $0x20] sm:$0xff]
        %v578 = vld [vmem:[#allocation8 + $0x28] sm:$0xff]
        %v579 = vld [vmem:[#allocation8 + $0x30] sm:$0xff]
        %v580 = vld [vmem:[#allocation8 + $0x38] sm:$0xff]
        %v581 = vld [vmem:[%s367] sm:$0x3]
        %v583 = vlaneseq
        %v584 = vshrl.u32 %v583, 7
        %v585 = vsub.s32 0, %v584
        %v586 = vrot.slane %v581, %v585
        %v587 = vlaneseq
        %v588 = vshrl.u32 %v587, 7
        %v589 = vsub.s32 1, %v588
        %v590 = vrot.slane %v581, %v589
        %vm593 = vcmask 261120
        %v595 = vsel %vm593, %v571, 0
        %v598 = vsel %vm593, %v572, 0
        %600 = vmatprep.subr.mxu0 %v574
        %601 = vmatpush1.msra.mxu0 %v573
        %602 = vmatprep.subr.mxu0 %v576
        %603 = vmatpush1.msra.mxu0 %v575
        %604 = vmatprep.subr.mxu0 %v578
        %605 = vmatpush1.msra.mxu0 %v577
        %606 = vmatprep.subr.mxu0 %v580
        %607 = vmatpush1.msra.mxu0 %v579
        %608 = vmatprep.subr.mxu0 0.0
        %609 = vmatpush1.msra.mxu0 0.0
        %610 = vmatprep.subr.mxu0 0.0
        %611 = vmatpush1.msra.mxu0 0.0
        %612 = vmatprep.subr.mxu0 0.0
        %613 = vmatpush1.msra.mxu0 0.0
        %614 = vmatprep.subr.mxu0 0.0
        %615 = vmatpush1.msra.mxu0 0.0
        %616 = vmatprep.subr.mxu0 0.0
        %617 = vmatpush1.msra.mxu0 0.0
        %618 = vmatprep.subr.mxu0 0.0
        %619 = vmatpush1.msra.mxu0 0.0
        %620 = vmatprep.subr.mxu0 0.0
        %621 = vmatpush1.msra.mxu0 0.0
        %622 = vmatprep.subr.mxu0 0.0
        %623 = vmatpush1.msra.mxu0 0.0
        %624 = vmatprep.subr.mxu0 0.0
        %625 = vmatpush1.msra.mxu0 0.0
        %626 = vmatprep.subr.mxu0 0.0
        %627 = vmatpush1.msra.mxu0 0.0
        %628 = vmatprep.subr.mxu0 0.0
        %629 = vmatpush1.msra.mxu0 0.0
        %630 = vmatprep.subr.mxu0 0.0
        %631 = vmatpush1.msra.mxu0 0.0
        %632 = vmatprep.subr.mxu0 0.0
        %633 = vmatpush1.msra.mxu0 0.0
        %634 = vmatprep.subr.mxu0 0.0
        %635 = vmatpush1.msra.mxu0 0.0
        %636 = vmatprep.subr.mxu0 0.0
        %637 = vmatpush1.msra.mxu0 0.0
        %638 = vmatprep.subr.mxu0 0.0
        %639 = vmatpush1.msra.mxu0 0.0
        %640 = vmatprep.subr.mxu0 0.0
        %641 = vmatpush1.msra.mxu0 0.0
        %642 = vmatprep.subr.mxu0 0.0
        %643 = vmatpush1.msra.mxu0 0.0
        %644 = vmatprep.subr.mxu0 0.0
        %645 = vmatpush1.msra.mxu0 0.0
        %646 = vmatprep.subr.mxu0 0.0
        %647 = vmatpush1.msra.mxu0 0.0
        %648 = vmatprep.subr.mxu0 0.0
        %649 = vmatpush1.msra.mxu0 0.0
        %650 = vmatprep.subr.mxu0 0.0
        %651 = vmatpush1.msra.mxu0 0.0
        %652 = vmatprep.subr.mxu0 0.0
        %653 = vmatpush1.msra.mxu0 0.0
        %654 = vmatprep.subr.mxu0 0.0
        %655 = vmatpush1.msra.mxu0 0.0
        %656 = vmatprep.subr.mxu0 0.0
        %657 = vmatpush1.msra.mxu0 0.0
        %658 = vmatprep.subr.mxu0 0.0
        %659 = vmatpush1.msra.mxu0 0.0
        %660 = vmatprep.subr.mxu0 0.0
        %661 = vmatpush1.msra.mxu0 0.0
        %662 = vmatprep.subr.mxu0 0.0
        %663 = vmatpush1.msra.mxu0 0.0
        %664 = vmatprep.mubr.f32.mxu0 0.0
        %665 = vmatmul.mubr.f32.gmra.mrb[0].mxu0 %v595
        %v666 = vpop.f32.mrb[0].mxu0
        %v667 = vadd.f32 %v586, %v666
        %v668 = vpop.f32.mrb[0].mxu0
        %v669 = vadd.f32 %v590, %v668
        %670 = vmatprep.mubr.f32.mxu0 0.0
        %671 = vmatmul.mubr.f32.gmra.mrb[0].mxu0 %v598
        %v672 = vpop.f32.mrb[0].mxu0
        %v673 = vadd.f32 %v586, %v672
        %v674 = vpop.f32.mrb[0].mxu0
        %v675 = vadd.f32 %v590, %v674
        %676 = vdwg.mxu0
        %677 = vst [vmem:[%s361] sm:$0xff] %v667
        %678 = vst [vmem:[%s361 + $0x8] sm:$0xff] %v669
        %679 = vst [vmem:[%s361 + $0x10] sm:$0xff] %v673
        %680 = vst [vmem:[%s361 + $0x18] sm:$0xff] %v675
        %s681 = sand.u32 %s209, 1
        %s682 = scalar_lea.sflag [#allocation5], %s681
        %s683 = sand.u32 %s209, 1
        %s684 = smul.addr %s683, 32
        %s685 = scalar_lea.vmem [#allocation9], %s684
        // Predicated region
        $region65: #{tpu_custom_call.1} parent=47 // pred_check
          %p686 = pneg %p219
        $region66: #{tpu_custom_call.1} parent=47 // pred_check_branch
          %688 = sbr.rel (%p686) target = $region68
        $region67: #{tpu_custom_call.1} parent=47 // pred_region
          %s689 = smul.u32 2, %s29
          %s690 = smul.u32 2, %s30
          %s692 = ssub.s32 512, 512
          %693 = vsyncadd %s682, %s692
          %s694 = smul.addr %s689, 2
          %s695 = sadd.s32 %s690, %s694
          %s696 = smul.addr %s695, 128
          %s697 = scalar_lea.hbm %s7, %s696
          %s698 = sshll.u32 %s685, 4
          %s699 = int_to_ptr.vmem [resolvable:$true] %s698
          %704 = dma.vmem_to_hbm [thread:$0]  %s699, 512, %s697, %s682, 256, 256, 16
        $region68: #{tpu_custom_call.1} parent=47 // pred_fallthru
          _
      $region48: #{tpu_custom_call.1} parent=5 // pred_fallthru
        _
      %p705 = scmp.le.s32.totalorder 2, %s20
      // Predicated region
      $region69: #{tpu_custom_call.1} parent=5 // pred_check
        %p706 = pneg %p705
      $region70: #{tpu_custom_call.1} parent=5 // pred_check_branch
        %708 = sbr.rel (%p706) target = $region72
      $region71: #{tpu_custom_call.1} parent=5 // pred_region
        %s709 = ssub.s32 %s20, 2
        // Predicated region
        $region73: #{tpu_custom_call.1} parent=71 // pred_check
          %p710 = pneg %p225
        $region74: #{tpu_custom_call.1} parent=71 // pred_check_branch
          %712 = sbr.rel (%p710) target = $region76
        $region75: #{tpu_custom_call.1} parent=71 // pred_region
          %s713 = sand.u32 %s210, 1
          %s714 = scalar_lea.sflag [#allocation5], %s713
          %s715 = sand.u32 %s210, 1
          %s716 = smul.addr %s715, 32
          %s717 = scalar_lea.vmem [#allocation9], %s716
          %718 = dma.done %s714, 512
        $region76: #{tpu_custom_call.1} parent=71 // pred_fallthru
          _
      $region72: #{tpu_custom_call.1} parent=5 // pred_fallthru
        _
    $region6: #{tpu_custom_call.1} parent=1 // loop_footer
      %s24 = sadd.s32 1, %s20
    $region7: #{tpu_custom_call.1} parent=1 // loop_footer_branch
      %19 = sbr.rel target = $region3
    $region8: #{tpu_custom_call.1} parent=1 // loop_exit
      _
    %719 = vsyncpa [#allocation4], 1
    %s720 = scalar_lea.sflag [#allocation4], 1
    %721 = vsyncpa %s720, 1
    %722 = vsyncpa [#allocation7], 1
    %723 = vsyncpa [#allocation5], 1
    %s724 = scalar_lea.sflag [#allocation5], 1
    %725 = vsyncpa %s724, 1

</llo_original>
